<compile_context>
chip_gen: v7x
topology: tpu7x:2x2x1
jax: 0.10.0
libtpu: 0.0.40
codegen_flags: <defaults>
</compile_context>

<pallas_src>
import functools

import jax
import jax.numpy as jnp
from jax import lax
from jax.experimental import pallas as pl
from jax.experimental.pallas import tpu as pltpu


MATMUL_DTYPE = jnp.bfloat16  # MXU operand dtype (v6e/v7x win); elementwise stays f32.


def _round_up(x, m):
    return (x + m - 1) // m * m


def _vmem_capacity_bytes():
    """Per-core VMEM capacity; 128 MiB (v5e/v6e) if the query is unavailable."""
    try:
        info = pltpu.get_tpu_info()
        cap = getattr(info, "vmem_capacity_bytes", None)
        if cap:
            return int(cap)
    except Exception:
        pass
    return 128 << 20


def _mxu_m_dim():
    """MXU M dimension heuristic: 128 on v5e and earlier, 256 on v6e/v7x."""
    try:
        kind = jax.devices()[0].device_kind.lower()
        for old in ("v2", "v3", "v4", "v5"):
            if old in kind:
                return 128
    except Exception:
        pass
    return 256


def _pick_time_tile(seq_len, tt_max):
    """Prefer a divisor of T near the budget (no tail mask); else budget + mask."""
    tt_max = max(1, min(seq_len, tt_max))
    if tt_max >= seq_len:
        return seq_len, False
    best = 1
    for d in range(1, min(tt_max, 4096) + 1):
        if seq_len % d == 0:
            best = d
    if 2 * best >= tt_max:
        return best, False
    return tt_max, True


def _lstm_recurrence_kernel(gx_ref, whh_ref, wfc_ref, bfc_ref, out_ref,
                            h_scr, c_scr, *, hp, tt, seq_len, needs_mask,
                            unroll, mm_dtype):
    """Serial LSTM recurrence over one time tile + final linear head.

    Grid = (batch_chunks [parallel], time_chunks [arbitrary]).

    gx_ref : (Tt, Bt, 4*Hp) precomputed x-projection + bias (mm_dtype), streamed tile
    whh_ref: (Hp, 4*Hp)     hidden->gates weights (mm_dtype), resident
    wfc_ref: (Hp, L)        final linear weight (mm_dtype), resident
    bfc_ref: (1, L)         final linear bias (f32), resident
    out_ref: (Bt, L)        head applied to the last hidden state
    h_scr  : (Bt, Hp)       recurrent h state (mm_dtype), persists across time chunks
    c_scr  : (Bt, Hp)       recurrent c state (f32),      persists across time chunks
    """
    t_chunk = pl.program_id(1)
    nt = pl.num_programs(1)

    @pl.when(t_chunk == 0)
    def _():
        h_scr[...] = jnp.zeros_like(h_scr)
        c_scr[...] = jnp.zeros_like(c_scr)

    def one_step(t, masked):
        # One MXU push per step; gate pre-activations for the x path were hoisted.
        gates = gx_ref[t].astype(jnp.float32) + jnp.dot(
            h_scr[...].astype(mm_dtype), whh_ref[...],
            preferred_element_type=jnp.float32)
        # Gate bands at lane offsets k*Hp (Hp is either H itself when 4H<=128, or a
        # multiple of 128). PyTorch gate order: i, f, g, o.
        i_g = jax.nn.sigmoid(gates[:, 0 * hp:1 * hp])
        f_g = jax.nn.sigmoid(gates[:, 1 * hp:2 * hp])
        g_g = jnp.tanh(gates[:, 2 * hp:3 * hp])
        o_g = jax.nn.sigmoid(gates[:, 3 * hp:4 * hp])
        c_new = f_g * c_scr[...] + i_g * g_g
        h_new = (o_g * jnp.tanh(c_new)).astype(h_scr.dtype)
        if masked:  # only the last time chunk when T % Tt != 0
            valid = (t_chunk * tt + t) < seq_len
            c_new = jnp.where(valid, c_new, c_scr[...])
            h_new = jnp.where(valid, h_new, h_scr[...])
        c_scr[...] = c_new
        h_scr[...] = h_new

    def run(masked):
        def step(t, carry):
            one_step(t, masked)
            return carry
        lax.fori_loop(0, tt, step, 0, unroll=unroll)

    if needs_mask:
        @pl.when(t_chunk == nt - 1)
        def _():
            run(True)

        @pl.when(t_chunk != nt - 1)
        def _():
            run(False)
    else:
        run(False)

    # Final linear head on the last hidden state (== seq(lstm_out)[:, -1, :]).
    @pl.when(t_chunk == nt - 1)
    def _():
        out_ref[...] = (jnp.dot(h_scr[...].astype(mm_dtype), wfc_ref[...],
                                preferred_element_type=jnp.float32)
                        + bfc_ref[...]).astype(out_ref.dtype)


def _pad_gate_cols(w_t, h, hp):
    """(K, 4h) -> (K, 4hp): place each gate band at offset k*hp (identity if hp==h)."""
    if hp == h:
        return w_t
    k_dim = w_t.shape[0]
    out = jnp.zeros((k_dim, 4 * hp), w_t.dtype)
    for g in range(4):
        out = out.at[:, g * hp: g * hp + h].set(w_t[:, g * h:(g + 1) * h])
    return out


def lstm_model_forward(x, params, *, matmul_dtype=MATMUL_DTYPE):
    """x: (B, T, F) float32.  Returns (B, label_window, 1) float32."""
    x = x.astype(jnp.float32)
    B, T, F = x.shape
    H = params["w_hh"].shape[1]
    L = params["w_fc"].shape[0]

    mm_bytes = jnp.dtype(matmul_dtype).itemsize
    gx_dtype = matmul_dtype                 # stream gates_x in the MXU dtype
    gx_item = jnp.dtype(gx_dtype).itemsize
    vmem_cap = _vmem_capacity_bytes()       # 128 MiB (v5e/v6e) or 64 MiB (v7x)
    mxu_m = _mxu_m_dim()

    # ---- lane / sublane alignment --------------------------------------
    # Small-H fast path: all four gates fit in <=128 lanes -> no per-gate padding.
    Hp = H if 4 * H <= 128 else _round_up(H, 128)
    sub = 16 if gx_item == 2 else 8         # sublane packing granule for the gx stream
    Bp0 = _round_up(B, sub)

    # Batch tile: for large batches force >=2 chunks (v7x megacore) with Bt >= 64;
    # cap Bt at the MXU M dimension (128 on v5e, 256 on v6e/v7x).
    bt_cap = mxu_m
    if Bp0 >= 128:
        Bt = min(bt_cap, max(64, _round_up(-(-Bp0 // 2), sub)))
        Bp = _round_up(B, Bt)
    else:
        Bt = Bp0
        Bp = Bp0
    nb = Bp // Bt

    # ---- VMEM budget (generation-aware, counts hidden double-buffering) --
    # vmem_limit target: ~65% of capacity (=> ~41 MiB on v7x, ~83 MiB on v5e/v6e).
    vmem_target = min(int(vmem_cap * 0.65), vmem_cap - (16 << 20))
    fixed_bytes = (2 * Hp * 4 * Hp * mm_bytes        # W_hh (double-buffered)
                   + 2 * Hp * max(L, 128) * mm_bytes  # W_fc (double-buffered, lane pad)
                   + 2 * 8 * 128 * 4                  # b_fc tile
                   + 2 * Bt * max(L, 128) * 4         # output tile
                   + Bt * Hp * (mm_bytes + 4))        # h (mm dtype) / c (f32) scratch
    headroom = 8 << 20
    per_step_bytes = Bt * 4 * Hp * gx_item
    avail_for_gx = max(vmem_target - fixed_bytes - headroom, 1 << 20)
    gx_budget = min(vmem_cap // 6, avail_for_gx)      # ~21 MiB v5e/v6e, ~10 MiB v7x
    tt_max = max(1, gx_budget // (2 * per_step_bytes))
    Tt, needs_mask = _pick_time_tile(T, tt_max)
    nt = -(-T // Tt)
    Tp = nt * Tt

    vmem_limit = int(min(max(fixed_bytes + 2 * Tt * per_step_bytes + headroom,
                             32 << 20),
                         vmem_target))

    # ---- weight prep: transpose, lane-pad gate bands, matmul dtype ------
    # Padded gate columns of W_ih/W_hh and the bias are exactly zero, so padded h
    # columns stay 0 throughout the recurrence (they feed zero-padded W_hh rows).
    wih_t = _pad_gate_cols(params["w_ih"].astype(jnp.float32).T, H, Hp)      # (F, 4Hp)
    whh_t = _pad_gate_cols(params["w_hh"].astype(jnp.float32).T, H, Hp)      # (H, 4Hp)
    if Hp != H:
        whh_t = jnp.zeros((Hp, 4 * Hp), jnp.float32).at[:H].set(whh_t)       # (Hp, 4Hp)
    bias = _pad_gate_cols(
        (params["b_ih"] + params["b_hh"]).astype(jnp.float32)[None, :], H, Hp)  # (1, 4Hp)
    wfc_t = params["w_fc"].astype(jnp.float32).T                             # (H, L)
    if Hp != H:
        wfc_t = jnp.zeros((Hp, L), jnp.float32).at[:H].set(wfc_t)            # (Hp, L)
    bfc = params["b_fc"].astype(jnp.float32).reshape(1, L)                   # (1, L)

    # ---- hoisted input projection: one big (Tp*Bp, F) x (F, 4Hp) matmul --
    # Pad batch AND time on x (cheap, F columns) before the matmul; no second
    # full-size gx materialization. Padded timesteps are masked in-kernel.
    x_p = jnp.pad(x, ((0, Bp - B), (0, Tp - T), (0, 0)))                     # (Bp, Tp, F)
    x_tm = jnp.transpose(x_p, (1, 0, 2)).reshape(Tp * Bp, F)                 # time-major
    gx = (jnp.dot(x_tm.astype(matmul_dtype), wih_t.astype(matmul_dtype),
                  preferred_element_type=jnp.float32) + bias)                # f32
    gx = gx.astype(gx_dtype).reshape(Tp, Bp, 4 * Hp)                         # stream dtype

    whh_mm = whh_t.astype(matmul_dtype)
    wfc_mm = wfc_t.astype(matmul_dtype)

    unroll = max(1, min(Tt, 8))   # serial dep chain: >8 buys nothing, costs vregs

    kernel = functools.partial(
        _lstm_recurrence_kernel, hp=Hp, tt=Tt, seq_len=T, needs_mask=needs_mask,
        unroll=unroll, mm_dtype=matmul_dtype)

    grid_spec = pltpu.PrefetchScalarGridSpec(
        num_scalar_prefetch=0,
        grid=(nb, nt),
        in_specs=[
            pl.BlockSpec((Tt, Bt, 4 * Hp), lambda b, t: (t, b, 0)),   # streamed gates_x
            pl.BlockSpec((Hp, 4 * Hp), lambda b, t: (0, 0)),          # resident W_hh
            pl.BlockSpec((Hp, L), lambda b, t: (0, 0)),               # resident W_fc
            pl.BlockSpec((1, L), lambda b, t: (0, 0)),                # resident b_fc
        ],
        out_specs=pl.BlockSpec((Bt, L), lambda b, t: (b, 0)),
        scratch_shapes=[pltpu.VMEM((Bt, Hp), matmul_dtype),           # h state (MXU dtype)
                        pltpu.VMEM((Bt, Hp), jnp.float32)],           # c state (f32)
    )

    out = pl.pallas_call(
        kernel,
        out_shape=jax.ShapeDtypeStruct((Bp, L), jnp.float32),
        grid_spec=grid_spec,
        compiler_params=pltpu.CompilerParams(
            dimension_semantics=("parallel", "arbitrary"),
            vmem_limit_bytes=vmem_limit),
    )(gx, whh_mm, wfc_mm, bfc)

    return out[:B, :, None]                                           # (B, L, 1)


def init_params(key, feature_size, hidden_size, label_window):
    ks = jax.random.split(key, 6)
    s = 1.0 / jnp.sqrt(hidden_size)
    u = lambda k, shape: jax.random.uniform(k, shape, jnp.float32, -s, s)
    return {
        "w_ih": u(ks[0], (4 * hidden_size, feature_size)),
        "w_hh": u(ks[1], (4 * hidden_size, hidden_size)),
        "b_ih": u(ks[2], (4 * hidden_size,)),
        "b_hh": u(ks[3], (4 * hidden_size,)),
        "w_fc": u(ks[4], (label_window, hidden_size)),
        "b_fc": u(ks[5], (label_window,)),
    }


def reference_forward(x, params):
    """Pure-JAX f32 reference matching PyTorch LSTM + Linear semantics."""
    B, T, F = x.shape
    H = params["w_hh"].shape[1]
    wih_t = params["w_ih"].T
    whh_t = params["w_hh"].T
    b = params["b_ih"] + params["b_hh"]

    def step(carry, x_t):
        h, c = carry
        g = x_t @ wih_t + h @ whh_t + b
        i = jax.nn.sigmoid(g[:, 0 * H:1 * H])
        f = jax.nn.sigmoid(g[:, 1 * H:2 * H])
        gg = jnp.tanh(g[:, 2 * H:3 * H])
        o = jax.nn.sigmoid(g[:, 3 * H:4 * H])
        c = f * c + i * gg
        h = o * jnp.tanh(c)
        return (h, c), None

    (h, _), _ = lax.scan(step, (jnp.zeros((B, H), jnp.float32),
                                jnp.zeros((B, H), jnp.float32)),
                         jnp.transpose(x, (1, 0, 2)))
    out = h @ params["w_fc"].T + params["b_fc"]
    return out[:, :, None]


if __name__ == "__main__":
    # Small shapes consistent with the module: batch=2, seq=8, feature=5,
    # hidden=32, label_window=5.
    B, T, F = 2, 8, 5
    HIDDEN, LABEL = 32, 5

    key = jax.random.PRNGKey(0)
    kx, kp = jax.random.split(key)
    x = jax.random.normal(kx, (B, T, F), jnp.float32)
    params = init_params(kp, F, HIDDEN, LABEL)

    ref = reference_forward(x, params)

    # Strict check with f32 MXU operands / f32 gx stream.
    out_f32 = jax.block_until_ready(lstm_model_forward(x, params,
                                                       matmul_dtype=jnp.float32))
    assert out_f32.shape == (B, LABEL, 1), out_f32.shape
    assert jnp.allclose(out_f32, ref, atol=1e-5, rtol=1e-5), "f32 mismatch vs reference"

    # bf16 MXU-operand path (default): looser tolerance vs the f32 reference.
    out_bf16 = jax.block_until_ready(lstm_model_forward(x, params,
                                                        matmul_dtype=jnp.bfloat16))
    assert out_bf16.shape == (B, LABEL, 1), out_bf16.shape
    assert jnp.allclose(out_bf16, ref, atol=5e-2, rtol=5e-2), "bf16 mismatch vs reference"

    print("KERNEL_OK")
</pallas_src>

<mosaic_0001>
module attributes {stable_mosaic.version = 11 : i64} {
  func.func @_lstm_recurrence_kernel(%arg0: i32, %arg1: i32, %arg2: memref<8x8x128xf32, #tpu.memory_space<vmem>>, %arg3: memref<32x128xf32, #tpu.memory_space<vmem>>, %arg4: memref<32x5xf32, #tpu.memory_space<vmem>>, %arg5: memref<1x5xf32, #tpu.memory_space<vmem>>, %arg6: memref<8x5xf32, #tpu.memory_space<vmem>>, %arg7: memref<8x32xf32, #tpu.memory_space<vmem>>, %arg8: memref<8x32xf32, #tpu.memory_space<vmem>>) attributes {dimension_semantics = [#tpu.dimension_semantics<parallel>, #tpu.dimension_semantics<arbitrary>], iteration_bounds = array<i64: 1, 1>, scalar_prefetch = 0 : i64, scratch_operands = 2 : i64, tpu.core_type = #tpu.core_type<tc>, window_params = [{transform_indices = @transform_0, window_bounds = array<i64: 8, 8, 128>}, {pipeline_mode = #tpu.pipeline_mode<synchronous>, transform_indices = @transform_1, window_bounds = array<i64: 32, 128>}, {pipeline_mode = #tpu.pipeline_mode<synchronous>, transform_indices = @transform_2, window_bounds = array<i64: 32, 5>}, {pipeline_mode = #tpu.pipeline_mode<synchronous>, transform_indices = @transform_3, window_bounds = array<i64: 1, 5>}, {transform_indices = @transform_4, window_bounds = array<i64: 8, 5>}]} {
    %c0_i32 = arith.constant 0 : i32
    %0 = arith.cmpi eq, %arg1, %c0_i32 : i32
    %1 = arith.extui %0 : i1 to i32
    %c0_i32_0 = arith.constant 0 : i32
    %2 = arith.cmpi ne, %1, %c0_i32_0 : i32
    scf.if %2 {
      %cst_130 = arith.constant 0.000000e+00 : f32
      %286 = vector.broadcast %cst_130 : f32 to vector<8x32xf32>
      %c0_131 = arith.constant 0 : index
      %c0_132 = arith.constant 0 : index
      %287 = vector.load %arg7[%c0_131, %c0_132] : memref<8x32xf32, #tpu.memory_space<vmem>>, vector<8x32xf32>
      tpu.vector_store %arg7[%c0_131, %c0_132], %286 {strides = array<i32>} : memref<8x32xf32, #tpu.memory_space<vmem>>, vector<8x32xf32>,
      %cst_133 = arith.constant 0.000000e+00 : f32
      %288 = vector.broadcast %cst_133 : f32 to vector<8x32xf32>
      %c0_134 = arith.constant 0 : index
      %c0_135 = arith.constant 0 : index
      %289 = vector.load %arg8[%c0_134, %c0_135] : memref<8x32xf32, #tpu.memory_space<vmem>>, vector<8x32xf32>
      tpu.vector_store %arg8[%c0_134, %c0_135], %288 {strides = array<i32>} : memref<8x32xf32, #tpu.memory_space<vmem>>, vector<8x32xf32>,
    } else {
    }
    %c0_i32_1 = arith.constant 0 : i32
    %3 = arith.index_cast %c0_i32_1 : i32 to index
    %c0 = arith.constant 0 : index
    %c0_2 = arith.constant 0 : index
    %4 = vector.load %arg2[%3, %c0, %c0_2] : memref<8x8x128xf32, #tpu.memory_space<vmem>>, vector<1x8x128xf32>
    %5 = vector.shape_cast %4 : vector<1x8x128xf32> to vector<8x128xf32>
    %c0_3 = arith.constant 0 : index
    %c0_4 = arith.constant 0 : index
    %6 = vector.load %arg7[%c0_3, %c0_4] : memref<8x32xf32, #tpu.memory_space<vmem>>, vector<8x32xf32>
    %c0_5 = arith.constant 0 : index
    %c0_6 = arith.constant 0 : index
    %7 = vector.load %arg3[%c0_5, %c0_6] : memref<32x128xf32, #tpu.memory_space<vmem>>, vector<32x128xf32>
    %cst = arith.constant dense<0.000000e+00> : vector<8x128xf32>
    %8 = tpu.matmul %6, %7, %cst {dimension_numbers = #tpu.dot_dimension_numbers<[1], [0], [0], [1], [0, 0, 1, 1], [], []>} : vector<8x32xf32>, vector<32x128xf32>, vector<8x128xf32> -> vector<8x128xf32>
    %9 = arith.addf %5, %8 : vector<8x128xf32>
    %10 = vector.extract_strided_slice %9 {offsets = [0, 0], sizes = [8, 32], strides = [1, 1]} : vector<8x128xf32> to vector<8x32xf32>
    %11 = arith.negf %10 : vector<8x32xf32>
    %12 = math.exp %11 : vector<8x32xf32>
    %cst_7 = arith.constant 1.000000e+00 : f32
    %13 = vector.broadcast %cst_7 : f32 to vector<8x32xf32>
    %14 = arith.addf %13, %12 : vector<8x32xf32>
    %15 = arith.divf %13, %14 : vector<8x32xf32>
    %16 = vector.extract_strided_slice %9 {offsets = [0, 32], sizes = [8, 32], strides = [1, 1]} : vector<8x128xf32> to vector<8x32xf32>
    %17 = arith.negf %16 : vector<8x32xf32>
    %18 = math.exp %17 : vector<8x32xf32>
    %cst_8 = arith.constant 1.000000e+00 : f32
    %19 = vector.broadcast %cst_8 : f32 to vector<8x32xf32>
    %20 = arith.addf %19, %18 : vector<8x32xf32>
    %21 = arith.divf %19, %20 : vector<8x32xf32>
    %22 = vector.extract_strided_slice %9 {offsets = [0, 64], sizes = [8, 32], strides = [1, 1]} : vector<8x128xf32> to vector<8x32xf32>
    %23 = math.tanh %22 : vector<8x32xf32>
    %24 = vector.extract_strided_slice %9 {offsets = [0, 96], sizes = [8, 32], strides = [1, 1]} : vector<8x128xf32> to vector<8x32xf32>
    %25 = arith.negf %24 : vector<8x32xf32>
    %26 = math.exp %25 : vector<8x32xf32>
    %cst_9 = arith.constant 1.000000e+00 : f32
    %27 = vector.broadcast %cst_9 : f32 to vector<8x32xf32>
    %28 = arith.addf %27, %26 : vector<8x32xf32>
    %29 = arith.divf %27, %28 : vector<8x32xf32>
    %c0_10 = arith.constant 0 : index
    %c0_11 = arith.constant 0 : index
    %30 = vector.load %arg8[%c0_10, %c0_11] : memref<8x32xf32, #tpu.memory_space<vmem>>, vector<8x32xf32>
    %31 = arith.mulf %21, %30 : vector<8x32xf32>
    %32 = arith.mulf %15, %23 : vector<8x32xf32>
    %33 = arith.addf %31, %32 : vector<8x32xf32>
    %34 = math.tanh %33 : vector<8x32xf32>
    %35 = arith.mulf %29, %34 : vector<8x32xf32>
    %c0_12 = arith.constant 0 : index
    %c0_13 = arith.constant 0 : index
    %36 = vector.load %arg8[%c0_12, %c0_13] : memref<8x32xf32, #tpu.memory_space<vmem>>, vector<8x32xf32>
    tpu.vector_store %arg8[%c0_12, %c0_13], %33 {strides = array<i32>} : memref<8x32xf32, #tpu.memory_space<vmem>>, vector<8x32xf32>,
    %c0_14 = arith.constant 0 : index
    %c0_15 = arith.constant 0 : index
    %37 = vector.load %arg7[%c0_14, %c0_15] : memref<8x32xf32, #tpu.memory_space<vmem>>, vector<8x32xf32>
    tpu.vector_store %arg7[%c0_14, %c0_15], %35 {strides = array<i32>} : memref<8x32xf32, #tpu.memory_space<vmem>>, vector<8x32xf32>,
    %c1_i32 = arith.constant 1 : i32
    %38 = arith.index_cast %c1_i32 : i32 to index
    %c0_16 = arith.constant 0 : index
    %c0_17 = arith.constant 0 : index
    %39 = vector.load %arg2[%38, %c0_16, %c0_17] : memref<8x8x128xf32, #tpu.memory_space<vmem>>, vector<1x8x128xf32>
    %40 = vector.shape_cast %39 : vector<1x8x128xf32> to vector<8x128xf32>
    %c0_18 = arith.constant 0 : index
    %c0_19 = arith.constant 0 : index
    %41 = vector.load %arg7[%c0_18, %c0_19] : memref<8x32xf32, #tpu.memory_space<vmem>>, vector<8x32xf32>
    %c0_20 = arith.constant 0 : index
    %c0_21 = arith.constant 0 : index
    %42 = vector.load %arg3[%c0_20, %c0_21] : memref<32x128xf32, #tpu.memory_space<vmem>>, vector<32x128xf32>
    %cst_22 = arith.constant dense<0.000000e+00> : vector<8x128xf32>
    %43 = tpu.matmul %41, %42, %cst_22 {dimension_numbers = #tpu.dot_dimension_numbers<[1], [0], [0], [1], [0, 0, 1, 1], [], []>} : vector<8x32xf32>, vector<32x128xf32>, vector<8x128xf32> -> vector<8x128xf32>
    %44 = arith.addf %40, %43 : vector<8x128xf32>
    %45 = vector.extract_strided_slice %44 {offsets = [0, 0], sizes = [8, 32], strides = [1, 1]} : vector<8x128xf32> to vector<8x32xf32>
    %46 = arith.negf %45 : vector<8x32xf32>
    %47 = math.exp %46 : vector<8x32xf32>
    %cst_23 = arith.constant 1.000000e+00 : f32
    %48 = vector.broadcast %cst_23 : f32 to vector<8x32xf32>
    %49 = arith.addf %48, %47 : vector<8x32xf32>
    %50 = arith.divf %48, %49 : vector<8x32xf32>
    %51 = vector.extract_strided_slice %44 {offsets = [0, 32], sizes = [8, 32], strides = [1, 1]} : vector<8x128xf32> to vector<8x32xf32>
    %52 = arith.negf %51 : vector<8x32xf32>
    %53 = math.exp %52 : vector<8x32xf32>
    %cst_24 = arith.constant 1.000000e+00 : f32
    %54 = vector.broadcast %cst_24 : f32 to vector<8x32xf32>
    %55 = arith.addf %54, %53 : vector<8x32xf32>
    %56 = arith.divf %54, %55 : vector<8x32xf32>
    %57 = vector.extract_strided_slice %44 {offsets = [0, 64], sizes = [8, 32], strides = [1, 1]} : vector<8x128xf32> to vector<8x32xf32>
    %58 = math.tanh %57 : vector<8x32xf32>
    %59 = vector.extract_strided_slice %44 {offsets = [0, 96], sizes = [8, 32], strides = [1, 1]} : vector<8x128xf32> to vector<8x32xf32>
    %60 = arith.negf %59 : vector<8x32xf32>
    %61 = math.exp %60 : vector<8x32xf32>
    %cst_25 = arith.constant 1.000000e+00 : f32
    %62 = vector.broadcast %cst_25 : f32 to vector<8x32xf32>
    %63 = arith.addf %62, %61 : vector<8x32xf32>
    %64 = arith.divf %62, %63 : vector<8x32xf32>
    %c0_26 = arith.constant 0 : index
    %c0_27 = arith.constant 0 : index
    %65 = vector.load %arg8[%c0_26, %c0_27] : memref<8x32xf32, #tpu.memory_space<vmem>>, vector<8x32xf32>
    %66 = arith.mulf %56, %65 : vector<8x32xf32>
    %67 = arith.mulf %50, %58 : vector<8x32xf32>
    %68 = arith.addf %66, %67 : vector<8x32xf32>
    %69 = math.tanh %68 : vector<8x32xf32>
    %70 = arith.mulf %64, %69 : vector<8x32xf32>
    %c0_28 = arith.constant 0 : index
    %c0_29 = arith.constant 0 : index
    %71 = vector.load %arg8[%c0_28, %c0_29] : memref<8x32xf32, #tpu.memory_space<vmem>>, vector<8x32xf32>
    tpu.vector_store %arg8[%c0_28, %c0_29], %68 {strides = array<i32>} : memref<8x32xf32, #tpu.memory_space<vmem>>, vector<8x32xf32>,
    %c0_30 = arith.constant 0 : index
    %c0_31 = arith.constant 0 : index
    %72 = vector.load %arg7[%c0_30, %c0_31] : memref<8x32xf32, #tpu.memory_space<vmem>>, vector<8x32xf32>
    tpu.vector_store %arg7[%c0_30, %c0_31], %70 {strides = array<i32>} : memref<8x32xf32, #tpu.memory_space<vmem>>, vector<8x32xf32>,
    %c2_i32 = arith.constant 2 : i32
    %73 = arith.index_cast %c2_i32 : i32 to index
    %c0_32 = arith.constant 0 : index
    %c0_33 = arith.constant 0 : index
    %74 = vector.load %arg2[%73, %c0_32, %c0_33] : memref<8x8x128xf32, #tpu.memory_space<vmem>>, vector<1x8x128xf32>
    %75 = vector.shape_cast %74 : vector<1x8x128xf32> to vector<8x128xf32>
    %c0_34 = arith.constant 0 : index
    %c0_35 = arith.constant 0 : index
    %76 = vector.load %arg7[%c0_34, %c0_35] : memref<8x32xf32, #tpu.memory_space<vmem>>, vector<8x32xf32>
    %c0_36 = arith.constant 0 : index
    %c0_37 = arith.constant 0 : index
    %77 = vector.load %arg3[%c0_36, %c0_37] : memref<32x128xf32, #tpu.memory_space<vmem>>, vector<32x128xf32>
    %cst_38 = arith.constant dense<0.000000e+00> : vector<8x128xf32>
    %78 = tpu.matmul %76, %77, %cst_38 {dimension_numbers = #tpu.dot_dimension_numbers<[1], [0], [0], [1], [0, 0, 1, 1], [], []>} : vector<8x32xf32>, vector<32x128xf32>, vector<8x128xf32> -> vector<8x128xf32>
    %79 = arith.addf %75, %78 : vector<8x128xf32>
    %80 = vector.extract_strided_slice %79 {offsets = [0, 0], sizes = [8, 32], strides = [1, 1]} : vector<8x128xf32> to vector<8x32xf32>
    %81 = arith.negf %80 : vector<8x32xf32>
    %82 = math.exp %81 : vector<8x32xf32>
    %cst_39 = arith.constant 1.000000e+00 : f32
    %83 = vector.broadcast %cst_39 : f32 to vector<8x32xf32>
    %84 = arith.addf %83, %82 : vector<8x32xf32>
    %85 = arith.divf %83, %84 : vector<8x32xf32>
    %86 = vector.extract_strided_slice %79 {offsets = [0, 32], sizes = [8, 32], strides = [1, 1]} : vector<8x128xf32> to vector<8x32xf32>
    %87 = arith.negf %86 : vector<8x32xf32>
    %88 = math.exp %87 : vector<8x32xf32>
    %cst_40 = arith.constant 1.000000e+00 : f32
    %89 = vector.broadcast %cst_40 : f32 to vector<8x32xf32>
    %90 = arith.addf %89, %88 : vector<8x32xf32>
    %91 = arith.divf %89, %90 : vector<8x32xf32>
    %92 = vector.extract_strided_slice %79 {offsets = [0, 64], sizes = [8, 32], strides = [1, 1]} : vector<8x128xf32> to vector<8x32xf32>
    %93 = math.tanh %92 : vector<8x32xf32>
    %94 = vector.extract_strided_slice %79 {offsets = [0, 96], sizes = [8, 32], strides = [1, 1]} : vector<8x128xf32> to vector<8x32xf32>
    %95 = arith.negf %94 : vector<8x32xf32>
    %96 = math.exp %95 : vector<8x32xf32>
    %cst_41 = arith.constant 1.000000e+00 : f32
    %97 = vector.broadcast %cst_41 : f32 to vector<8x32xf32>
    %98 = arith.addf %97, %96 : vector<8x32xf32>
    %99 = arith.divf %97, %98 : vector<8x32xf32>
    %c0_42 = arith.constant 0 : index
    %c0_43 = arith.constant 0 : index
    %100 = vector.load %arg8[%c0_42, %c0_43] : memref<8x32xf32, #tpu.memory_space<vmem>>, vector<8x32xf32>
    %101 = arith.mulf %91, %100 : vector<8x32xf32>
    %102 = arith.mulf %85, %93 : vector<8x32xf32>
    %103 = arith.addf %101, %102 : vector<8x32xf32>
    %104 = math.tanh %103 : vector<8x32xf32>
    %105 = arith.mulf %99, %104 : vector<8x32xf32>
    %c0_44 = arith.constant 0 : index
    %c0_45 = arith.constant 0 : index
    %106 = vector.load %arg8[%c0_44, %c0_45] : memref<8x32xf32, #tpu.memory_space<vmem>>, vector<8x32xf32>
    tpu.vector_store %arg8[%c0_44, %c0_45], %103 {strides = array<i32>} : memref<8x32xf32, #tpu.memory_space<vmem>>, vector<8x32xf32>,
    %c0_46 = arith.constant 0 : index
    %c0_47 = arith.constant 0 : index
    %107 = vector.load %arg7[%c0_46, %c0_47] : memref<8x32xf32, #tpu.memory_space<vmem>>, vector<8x32xf32>
    tpu.vector_store %arg7[%c0_46, %c0_47], %105 {strides = array<i32>} : memref<8x32xf32, #tpu.memory_space<vmem>>, vector<8x32xf32>,
    %c3_i32 = arith.constant 3 : i32
    %108 = arith.index_cast %c3_i32 : i32 to index
    %c0_48 = arith.constant 0 : index
    %c0_49 = arith.constant 0 : index
    %109 = vector.load %arg2[%108, %c0_48, %c0_49] : memref<8x8x128xf32, #tpu.memory_space<vmem>>, vector<1x8x128xf32>
    %110 = vector.shape_cast %109 : vector<1x8x128xf32> to vector<8x128xf32>
    %c0_50 = arith.constant 0 : index
    %c0_51 = arith.constant 0 : index
    %111 = vector.load %arg7[%c0_50, %c0_51] : memref<8x32xf32, #tpu.memory_space<vmem>>, vector<8x32xf32>
    %c0_52 = arith.constant 0 : index
    %c0_53 = arith.constant 0 : index
    %112 = vector.load %arg3[%c0_52, %c0_53] : memref<32x128xf32, #tpu.memory_space<vmem>>, vector<32x128xf32>
    %cst_54 = arith.constant dense<0.000000e+00> : vector<8x128xf32>
    %113 = tpu.matmul %111, %112, %cst_54 {dimension_numbers = #tpu.dot_dimension_numbers<[1], [0], [0], [1], [0, 0, 1, 1], [], []>} : vector<8x32xf32>, vector<32x128xf32>, vector<8x128xf32> -> vector<8x128xf32>
    %114 = arith.addf %110, %113 : vector<8x128xf32>
    %115 = vector.extract_strided_slice %114 {offsets = [0, 0], sizes = [8, 32], strides = [1, 1]} : vector<8x128xf32> to vector<8x32xf32>
    %116 = arith.negf %115 : vector<8x32xf32>
    %117 = math.exp %116 : vector<8x32xf32>
    %cst_55 = arith.constant 1.000000e+00 : f32
    %118 = vector.broadcast %cst_55 : f32 to vector<8x32xf32>
    %119 = arith.addf %118, %117 : vector<8x32xf32>
    %120 = arith.divf %118, %119 : vector<8x32xf32>
    %121 = vector.extract_strided_slice %114 {offsets = [0, 32], sizes = [8, 32], strides = [1, 1]} : vector<8x128xf32> to vector<8x32xf32>
    %122 = arith.negf %121 : vector<8x32xf32>
    %123 = math.exp %122 : vector<8x32xf32>
    %cst_56 = arith.constant 1.000000e+00 : f32
    %124 = vector.broadcast %cst_56 : f32 to vector<8x32xf32>
    %125 = arith.addf %124, %123 : vector<8x32xf32>
    %126 = arith.divf %124, %125 : vector<8x32xf32>
    %127 = vector.extract_strided_slice %114 {offsets = [0, 64], sizes = [8, 32], strides = [1, 1]} : vector<8x128xf32> to vector<8x32xf32>
    %128 = math.tanh %127 : vector<8x32xf32>
    %129 = vector.extract_strided_slice %114 {offsets = [0, 96], sizes = [8, 32], strides = [1, 1]} : vector<8x128xf32> to vector<8x32xf32>
    %130 = arith.negf %129 : vector<8x32xf32>
    %131 = math.exp %130 : vector<8x32xf32>
    %cst_57 = arith.constant 1.000000e+00 : f32
    %132 = vector.broadcast %cst_57 : f32 to vector<8x32xf32>
    %133 = arith.addf %132, %131 : vector<8x32xf32>
    %134 = arith.divf %132, %133 : vector<8x32xf32>
    %c0_58 = arith.constant 0 : index
    %c0_59 = arith.constant 0 : index
    %135 = vector.load %arg8[%c0_58, %c0_59] : memref<8x32xf32, #tpu.memory_space<vmem>>, vector<8x32xf32>
    %136 = arith.mulf %126, %135 : vector<8x32xf32>
    %137 = arith.mulf %120, %128 : vector<8x32xf32>
    %138 = arith.addf %136, %137 : vector<8x32xf32>
    %139 = math.tanh %138 : vector<8x32xf32>
    %140 = arith.mulf %134, %139 : vector<8x32xf32>
    %c0_60 = arith.constant 0 : index
    %c0_61 = arith.constant 0 : index
    %141 = vector.load %arg8[%c0_60, %c0_61] : memref<8x32xf32, #tpu.memory_space<vmem>>, vector<8x32xf32>
    tpu.vector_store %arg8[%c0_60, %c0_61], %138 {strides = array<i32>} : memref<8x32xf32, #tpu.memory_space<vmem>>, vector<8x32xf32>,
    %c0_62 = arith.constant 0 : index
    %c0_63 = arith.constant 0 : index
    %142 = vector.load %arg7[%c0_62, %c0_63] : memref<8x32xf32, #tpu.memory_space<vmem>>, vector<8x32xf32>
    tpu.vector_store %arg7[%c0_62, %c0_63], %140 {strides = array<i32>} : memref<8x32xf32, #tpu.memory_space<vmem>>, vector<8x32xf32>,
    %c4_i32 = arith.constant 4 : i32
    %143 = arith.index_cast %c4_i32 : i32 to index
    %c0_64 = arith.constant 0 : index
    %c0_65 = arith.constant 0 : index
    %144 = vector.load %arg2[%143, %c0_64, %c0_65] : memref<8x8x128xf32, #tpu.memory_space<vmem>>, vector<1x8x128xf32>
    %145 = vector.shape_cast %144 : vector<1x8x128xf32> to vector<8x128xf32>
    %c0_66 = arith.constant 0 : index
    %c0_67 = arith.constant 0 : index
    %146 = vector.load %arg7[%c0_66, %c0_67] : memref<8x32xf32, #tpu.memory_space<vmem>>, vector<8x32xf32>
    %c0_68 = arith.constant 0 : index
    %c0_69 = arith.constant 0 : index
    %147 = vector.load %arg3[%c0_68, %c0_69] : memref<32x128xf32, #tpu.memory_space<vmem>>, vector<32x128xf32>
    %cst_70 = arith.constant dense<0.000000e+00> : vector<8x128xf32>
    %148 = tpu.matmul %146, %147, %cst_70 {dimension_numbers = #tpu.dot_dimension_numbers<[1], [0], [0], [1], [0, 0, 1, 1], [], []>} : vector<8x32xf32>, vector<32x128xf32>, vector<8x128xf32> -> vector<8x128xf32>
    %149 = arith.addf %145, %148 : vector<8x128xf32>
    %150 = vector.extract_strided_slice %149 {offsets = [0, 0], sizes = [8, 32], strides = [1, 1]} : vector<8x128xf32> to vector<8x32xf32>
    %151 = arith.negf %150 : vector<8x32xf32>
    %152 = math.exp %151 : vector<8x32xf32>
    %cst_71 = arith.constant 1.000000e+00 : f32
    %153 = vector.broadcast %cst_71 : f32 to vector<8x32xf32>
    %154 = arith.addf %153, %152 : vector<8x32xf32>
    %155 = arith.divf %153, %154 : vector<8x32xf32>
    %156 = vector.extract_strided_slice %149 {offsets = [0, 32], sizes = [8, 32], strides = [1, 1]} : vector<8x128xf32> to vector<8x32xf32>
    %157 = arith.negf %156 : vector<8x32xf32>
    %158 = math.exp %157 : vector<8x32xf32>
    %cst_72 = arith.constant 1.000000e+00 : f32
    %159 = vector.broadcast %cst_72 : f32 to vector<8x32xf32>
    %160 = arith.addf %159, %158 : vector<8x32xf32>
    %161 = arith.divf %159, %160 : vector<8x32xf32>
    %162 = vector.extract_strided_slice %149 {offsets = [0, 64], sizes = [8, 32], strides = [1, 1]} : vector<8x128xf32> to vector<8x32xf32>
    %163 = math.tanh %162 : vector<8x32xf32>
    %164 = vector.extract_strided_slice %149 {offsets = [0, 96], sizes = [8, 32], strides = [1, 1]} : vector<8x128xf32> to vector<8x32xf32>
    %165 = arith.negf %164 : vector<8x32xf32>
    %166 = math.exp %165 : vector<8x32xf32>
    %cst_73 = arith.constant 1.000000e+00 : f32
    %167 = vector.broadcast %cst_73 : f32 to vector<8x32xf32>
    %168 = arith.addf %167, %166 : vector<8x32xf32>
    %169 = arith.divf %167, %168 : vector<8x32xf32>
    %c0_74 = arith.constant 0 : index
    %c0_75 = arith.constant 0 : index
    %170 = vector.load %arg8[%c0_74, %c0_75] : memref<8x32xf32, #tpu.memory_space<vmem>>, vector<8x32xf32>
    %171 = arith.mulf %161, %170 : vector<8x32xf32>
    %172 = arith.mulf %155, %163 : vector<8x32xf32>
    %173 = arith.addf %171, %172 : vector<8x32xf32>
    %174 = math.tanh %173 : vector<8x32xf32>
    %175 = arith.mulf %169, %174 : vector<8x32xf32>
    %c0_76 = arith.constant 0 : index
    %c0_77 = arith.constant 0 : index
    %176 = vector.load %arg8[%c0_76, %c0_77] : memref<8x32xf32, #tpu.memory_space<vmem>>, vector<8x32xf32>
    tpu.vector_store %arg8[%c0_76, %c0_77], %173 {strides = array<i32>} : memref<8x32xf32, #tpu.memory_space<vmem>>, vector<8x32xf32>,
    %c0_78 = arith.constant 0 : index
    %c0_79 = arith.constant 0 : index
    %177 = vector.load %arg7[%c0_78, %c0_79] : memref<8x32xf32, #tpu.memory_space<vmem>>, vector<8x32xf32>
    tpu.vector_store %arg7[%c0_78, %c0_79], %175 {strides = array<i32>} : memref<8x32xf32, #tpu.memory_space<vmem>>, vector<8x32xf32>,
    %c5_i32 = arith.constant 5 : i32
    %178 = arith.index_cast %c5_i32 : i32 to index
    %c0_80 = arith.constant 0 : index
    %c0_81 = arith.constant 0 : index
    %179 = vector.load %arg2[%178, %c0_80, %c0_81] : memref<8x8x128xf32, #tpu.memory_space<vmem>>, vector<1x8x128xf32>
    %180 = vector.shape_cast %179 : vector<1x8x128xf32> to vector<8x128xf32>
    %c0_82 = arith.constant 0 : index
    %c0_83 = arith.constant 0 : index
    %181 = vector.load %arg7[%c0_82, %c0_83] : memref<8x32xf32, #tpu.memory_space<vmem>>, vector<8x32xf32>
    %c0_84 = arith.constant 0 : index
    %c0_85 = arith.constant 0 : index
    %182 = vector.load %arg3[%c0_84, %c0_85] : memref<32x128xf32, #tpu.memory_space<vmem>>, vector<32x128xf32>
    %cst_86 = arith.constant dense<0.000000e+00> : vector<8x128xf32>
    %183 = tpu.matmul %181, %182, %cst_86 {dimension_numbers = #tpu.dot_dimension_numbers<[1], [0], [0], [1], [0, 0, 1, 1], [], []>} : vector<8x32xf32>, vector<32x128xf32>, vector<8x128xf32> -> vector<8x128xf32>
    %184 = arith.addf %180, %183 : vector<8x128xf32>
    %185 = vector.extract_strided_slice %184 {offsets = [0, 0], sizes = [8, 32], strides = [1, 1]} : vector<8x128xf32> to vector<8x32xf32>
    %186 = arith.negf %185 : vector<8x32xf32>
    %187 = math.exp %186 : vector<8x32xf32>
    %cst_87 = arith.constant 1.000000e+00 : f32
    %188 = vector.broadcast %cst_87 : f32 to vector<8x32xf32>
    %189 = arith.addf %188, %187 : vector<8x32xf32>
    %190 = arith.divf %188, %189 : vector<8x32xf32>
    %191 = vector.extract_strided_slice %184 {offsets = [0, 32], sizes = [8, 32], strides = [1, 1]} : vector<8x128xf32> to vector<8x32xf32>
    %192 = arith.negf %191 : vector<8x32xf32>
    %193 = math.exp %192 : vector<8x32xf32>
    %cst_88 = arith.constant 1.000000e+00 : f32
    %194 = vector.broadcast %cst_88 : f32 to vector<8x32xf32>
    %195 = arith.addf %194, %193 : vector<8x32xf32>
    %196 = arith.divf %194, %195 : vector<8x32xf32>
    %197 = vector.extract_strided_slice %184 {offsets = [0, 64], sizes = [8, 32], strides = [1, 1]} : vector<8x128xf32> to vector<8x32xf32>
    %198 = math.tanh %197 : vector<8x32xf32>
    %199 = vector.extract_strided_slice %184 {offsets = [0, 96], sizes = [8, 32], strides = [1, 1]} : vector<8x128xf32> to vector<8x32xf32>
    %200 = arith.negf %199 : vector<8x32xf32>
    %201 = math.exp %200 : vector<8x32xf32>
    %cst_89 = arith.constant 1.000000e+00 : f32
    %202 = vector.broadcast %cst_89 : f32 to vector<8x32xf32>
    %203 = arith.addf %202, %201 : vector<8x32xf32>
    %204 = arith.divf %202, %203 : vector<8x32xf32>
    %c0_90 = arith.constant 0 : index
    %c0_91 = arith.constant 0 : index
    %205 = vector.load %arg8[%c0_90, %c0_91] : memref<8x32xf32, #tpu.memory_space<vmem>>, vector<8x32xf32>
    %206 = arith.mulf %196, %205 : vector<8x32xf32>
    %207 = arith.mulf %190, %198 : vector<8x32xf32>
    %208 = arith.addf %206, %207 : vector<8x32xf32>
    %209 = math.tanh %208 : vector<8x32xf32>
    %210 = arith.mulf %204, %209 : vector<8x32xf32>
    %c0_92 = arith.constant 0 : index
    %c0_93 = arith.constant 0 : index
    %211 = vector.load %arg8[%c0_92, %c0_93] : memref<8x32xf32, #tpu.memory_space<vmem>>, vector<8x32xf32>
    tpu.vector_store %arg8[%c0_92, %c0_93], %208 {strides = array<i32>} : memref<8x32xf32, #tpu.memory_space<vmem>>, vector<8x32xf32>,
    %c0_94 = arith.constant 0 : index
    %c0_95 = arith.constant 0 : index
    %212 = vector.load %arg7[%c0_94, %c0_95] : memref<8x32xf32, #tpu.memory_space<vmem>>, vector<8x32xf32>
    tpu.vector_store %arg7[%c0_94, %c0_95], %210 {strides = array<i32>} : memref<8x32xf32, #tpu.memory_space<vmem>>, vector<8x32xf32>,
    %c6_i32 = arith.constant 6 : i32
    %213 = arith.index_cast %c6_i32 : i32 to index
    %c0_96 = arith.constant 0 : index
    %c0_97 = arith.constant 0 : index
    %214 = vector.load %arg2[%213, %c0_96, %c0_97] : memref<8x8x128xf32, #tpu.memory_space<vmem>>, vector<1x8x128xf32>
    %215 = vector.shape_cast %214 : vector<1x8x128xf32> to vector<8x128xf32>
    %c0_98 = arith.constant 0 : index
    %c0_99 = arith.constant 0 : index
    %216 = vector.load %arg7[%c0_98, %c0_99] : memref<8x32xf32, #tpu.memory_space<vmem>>, vector<8x32xf32>
    %c0_100 = arith.constant 0 : index
    %c0_101 = arith.constant 0 : index
    %217 = vector.load %arg3[%c0_100, %c0_101] : memref<32x128xf32, #tpu.memory_space<vmem>>, vector<32x128xf32>
    %cst_102 = arith.constant dense<0.000000e+00> : vector<8x128xf32>
    %218 = tpu.matmul %216, %217, %cst_102 {dimension_numbers = #tpu.dot_dimension_numbers<[1], [0], [0], [1], [0, 0, 1, 1], [], []>} : vector<8x32xf32>, vector<32x128xf32>, vector<8x128xf32> -> vector<8x128xf32>
    %219 = arith.addf %215, %218 : vector<8x128xf32>
    %220 = vector.extract_strided_slice %219 {offsets = [0, 0], sizes = [8, 32], strides = [1, 1]} : vector<8x128xf32> to vector<8x32xf32>
    %221 = arith.negf %220 : vector<8x32xf32>
    %222 = math.exp %221 : vector<8x32xf32>
    %cst_103 = arith.constant 1.000000e+00 : f32
    %223 = vector.broadcast %cst_103 : f32 to vector<8x32xf32>
    %224 = arith.addf %223, %222 : vector<8x32xf32>
    %225 = arith.divf %223, %224 : vector<8x32xf32>
    %226 = vector.extract_strided_slice %219 {offsets = [0, 32], sizes = [8, 32], strides = [1, 1]} : vector<8x128xf32> to vector<8x32xf32>
    %227 = arith.negf %226 : vector<8x32xf32>
    %228 = math.exp %227 : vector<8x32xf32>
    %cst_104 = arith.constant 1.000000e+00 : f32
    %229 = vector.broadcast %cst_104 : f32 to vector<8x32xf32>
    %230 = arith.addf %229, %228 : vector<8x32xf32>
    %231 = arith.divf %229, %230 : vector<8x32xf32>
    %232 = vector.extract_strided_slice %219 {offsets = [0, 64], sizes = [8, 32], strides = [1, 1]} : vector<8x128xf32> to vector<8x32xf32>
    %233 = math.tanh %232 : vector<8x32xf32>
    %234 = vector.extract_strided_slice %219 {offsets = [0, 96], sizes = [8, 32], strides = [1, 1]} : vector<8x128xf32> to vector<8x32xf32>
    %235 = arith.negf %234 : vector<8x32xf32>
    %236 = math.exp %235 : vector<8x32xf32>
    %cst_105 = arith.constant 1.000000e+00 : f32
    %237 = vector.broadcast %cst_105 : f32 to vector<8x32xf32>
    %238 = arith.addf %237, %236 : vector<8x32xf32>
    %239 = arith.divf %237, %238 : vector<8x32xf32>
    %c0_106 = arith.constant 0 : index
    %c0_107 = arith.constant 0 : index
    %240 = vector.load %arg8[%c0_106, %c0_107] : memref<8x32xf32, #tpu.memory_space<vmem>>, vector<8x32xf32>
    %241 = arith.mulf %231, %240 : vector<8x32xf32>
    %242 = arith.mulf %225, %233 : vector<8x32xf32>
    %243 = arith.addf %241, %242 : vector<8x32xf32>
    %244 = math.tanh %243 : vector<8x32xf32>
    %245 = arith.mulf %239, %244 : vector<8x32xf32>
    %c0_108 = arith.constant 0 : index
    %c0_109 = arith.constant 0 : index
    %246 = vector.load %arg8[%c0_108, %c0_109] : memref<8x32xf32, #tpu.memory_space<vmem>>, vector<8x32xf32>
    tpu.vector_store %arg8[%c0_108, %c0_109], %243 {strides = array<i32>} : memref<8x32xf32, #tpu.memory_space<vmem>>, vector<8x32xf32>,
    %c0_110 = arith.constant 0 : index
    %c0_111 = arith.constant 0 : index
    %247 = vector.load %arg7[%c0_110, %c0_111] : memref<8x32xf32, #tpu.memory_space<vmem>>, vector<8x32xf32>
    tpu.vector_store %arg7[%c0_110, %c0_111], %245 {strides = array<i32>} : memref<8x32xf32, #tpu.memory_space<vmem>>, vector<8x32xf32>,
    %c7_i32 = arith.constant 7 : i32
    %248 = arith.index_cast %c7_i32 : i32 to index
    %c0_112 = arith.constant 0 : index
    %c0_113 = arith.constant 0 : index
    %249 = vector.load %arg2[%248, %c0_112, %c0_113] : memref<8x8x128xf32, #tpu.memory_space<vmem>>, vector<1x8x128xf32>
    %250 = vector.shape_cast %249 : vector<1x8x128xf32> to vector<8x128xf32>
    %c0_114 = arith.constant 0 : index
    %c0_115 = arith.constant 0 : index
    %251 = vector.load %arg7[%c0_114, %c0_115] : memref<8x32xf32, #tpu.memory_space<vmem>>, vector<8x32xf32>
    %c0_116 = arith.constant 0 : index
    %c0_117 = arith.constant 0 : index
    %252 = vector.load %arg3[%c0_116, %c0_117] : memref<32x128xf32, #tpu.memory_space<vmem>>, vector<32x128xf32>
    %cst_118 = arith.constant dense<0.000000e+00> : vector<8x128xf32>
    %253 = tpu.matmul %251, %252, %cst_118 {dimension_numbers = #tpu.dot_dimension_numbers<[1], [0], [0], [1], [0, 0, 1, 1], [], []>} : vector<8x32xf32>, vector<32x128xf32>, vector<8x128xf32> -> vector<8x128xf32>
    %254 = arith.addf %250, %253 : vector<8x128xf32>
    %255 = vector.extract_strided_slice %254 {offsets = [0, 0], sizes = [8, 32], strides = [1, 1]} : vector<8x128xf32> to vector<8x32xf32>
    %256 = arith.negf %255 : vector<8x32xf32>
    %257 = math.exp %256 : vector<8x32xf32>
    %cst_119 = arith.constant 1.000000e+00 : f32
    %258 = vector.broadcast %cst_119 : f32 to vector<8x32xf32>
    %259 = arith.addf %258, %257 : vector<8x32xf32>
    %260 = arith.divf %258, %259 : vector<8x32xf32>
    %261 = vector.extract_strided_slice %254 {offsets = [0, 32], sizes = [8, 32], strides = [1, 1]} : vector<8x128xf32> to vector<8x32xf32>
    %262 = arith.negf %261 : vector<8x32xf32>
    %263 = math.exp %262 : vector<8x32xf32>
    %cst_120 = arith.constant 1.000000e+00 : f32
    %264 = vector.broadcast %cst_120 : f32 to vector<8x32xf32>
    %265 = arith.addf %264, %263 : vector<8x32xf32>
    %266 = arith.divf %264, %265 : vector<8x32xf32>
    %267 = vector.extract_strided_slice %254 {offsets = [0, 64], sizes = [8, 32], strides = [1, 1]} : vector<8x128xf32> to vector<8x32xf32>
    %268 = math.tanh %267 : vector<8x32xf32>
    %269 = vector.extract_strided_slice %254 {offsets = [0, 96], sizes = [8, 32], strides = [1, 1]} : vector<8x128xf32> to vector<8x32xf32>
    %270 = arith.negf %269 : vector<8x32xf32>
    %271 = math.exp %270 : vector<8x32xf32>
    %cst_121 = arith.constant 1.000000e+00 : f32
    %272 = vector.broadcast %cst_121 : f32 to vector<8x32xf32>
    %273 = arith.addf %272, %271 : vector<8x32xf32>
    %274 = arith.divf %272, %273 : vector<8x32xf32>
    %c0_122 = arith.constant 0 : index
    %c0_123 = arith.constant 0 : index
    %275 = vector.load %arg8[%c0_122, %c0_123] : memref<8x32xf32, #tpu.memory_space<vmem>>, vector<8x32xf32>
    %276 = arith.mulf %266, %275 : vector<8x32xf32>
    %277 = arith.mulf %260, %268 : vector<8x32xf32>
    %278 = arith.addf %276, %277 : vector<8x32xf32>
    %279 = math.tanh %278 : vector<8x32xf32>
    %280 = arith.mulf %274, %279 : vector<8x32xf32>
    %c0_124 = arith.constant 0 : index
    %c0_125 = arith.constant 0 : index
    %281 = vector.load %arg8[%c0_124, %c0_125] : memref<8x32xf32, #tpu.memory_space<vmem>>, vector<8x32xf32>
    tpu.vector_store %arg8[%c0_124, %c0_125], %278 {strides = array<i32>} : memref<8x32xf32, #tpu.memory_space<vmem>>, vector<8x32xf32>,
    %c0_126 = arith.constant 0 : index
    %c0_127 = arith.constant 0 : index
    %282 = vector.load %arg7[%c0_126, %c0_127] : memref<8x32xf32, #tpu.memory_space<vmem>>, vector<8x32xf32>
    tpu.vector_store %arg7[%c0_126, %c0_127], %280 {strides = array<i32>} : memref<8x32xf32, #tpu.memory_space<vmem>>, vector<8x32xf32>,
    %c8_i32 = arith.constant 8 : i32
    %c0_i32_128 = arith.constant 0 : i32
    %283 = arith.cmpi eq, %arg1, %c0_i32_128 : i32
    %284 = arith.extui %283 : i1 to i32
    %c0_i32_129 = arith.constant 0 : i32
    %285 = arith.cmpi ne, %284, %c0_i32_129 : i32
    scf.if %285 {
      %c0_130 = arith.constant 0 : index
      %c0_131 = arith.constant 0 : index
      %286 = vector.load %arg7[%c0_130, %c0_131] : memref<8x32xf32, #tpu.memory_space<vmem>>, vector<8x32xf32>
      %c0_132 = arith.constant 0 : index
      %c0_133 = arith.constant 0 : index
      %287 = vector.load %arg4[%c0_132, %c0_133] : memref<32x5xf32, #tpu.memory_space<vmem>>, vector<32x5xf32>
      %cst_134 = arith.constant dense<0.000000e+00> : vector<8x5xf32>
      %288 = tpu.matmul %286, %287, %cst_134 {dimension_numbers = #tpu.dot_dimension_numbers<[1], [0], [0], [1], [0, 0, 1, 1], [], []>} : vector<8x32xf32>, vector<32x5xf32>, vector<8x5xf32> -> vector<8x5xf32>
      %c0_135 = arith.constant 0 : index
      %c0_136 = arith.constant 0 : index
      %289 = vector.load %arg5[%c0_135, %c0_136] : memref<1x5xf32, #tpu.memory_space<vmem>>, vector<1x5xf32>
      %290 = vector.broadcast %289 : vector<1x5xf32> to vector<8x5xf32>
      %291 = arith.addf %288, %290 : vector<8x5xf32>
      %c0_137 = arith.constant 0 : index
      %c0_138 = arith.constant 0 : index
      %292 = vector.load %arg6[%c0_137, %c0_138] : memref<8x5xf32, #tpu.memory_space<vmem>>, vector<8x5xf32>
      tpu.vector_store %arg6[%c0_137, %c0_138], %291 {strides = array<i32>} : memref<8x5xf32, #tpu.memory_space<vmem>>, vector<8x5xf32>,
    } else {
    }
    return
  }
  func.func @transform_0(%arg0: i32, %arg1: i32) -> (i32, i32, i32) {
    %c0_i32 = arith.constant 0 : i32
    %c0_i32_0 = arith.constant 0 : i32
    return %arg1, %arg0, %c0_i32 : i32, i32, i32
  }
  func.func @transform_1(%arg0: i32, %arg1: i32) -> (i32, i32) {
    %c0_i32 = arith.constant 0 : i32
    %c0_i32_0 = arith.constant 0 : i32
    %c0_i32_1 = arith.constant 0 : i32
    return %c0_i32, %c0_i32_0 : i32, i32
  }
  func.func @transform_2(%arg0: i32, %arg1: i32) -> (i32, i32) {
    %c0_i32 = arith.constant 0 : i32
    %c0_i32_0 = arith.constant 0 : i32
    %c0_i32_1 = arith.constant 0 : i32
    return %c0_i32, %c0_i32_0 : i32, i32
  }
  func.func @transform_3(%arg0: i32, %arg1: i32) -> (i32, i32) {
    %c0_i32 = arith.constant 0 : i32
    %c0_i32_0 = arith.constant 0 : i32
    %c0_i32_1 = arith.constant 0 : i32
    return %c0_i32, %c0_i32_0 : i32, i32
  }
  func.func @transform_4(%arg0: i32, %arg1: i32) -> (i32, i32) {
    %c0_i32 = arith.constant 0 : i32
    %c0_i32_0 = arith.constant 0 : i32
    return %arg0, %c0_i32 : i32, i32
  }
}

</mosaic_0001>

<llo_original>
// kernel: tpu_custom_call.1
$region0: #{tpu_custom_call.1}
  #allocation0 [shape = 'u32[]', space=smem, size = 0x4, offset = 0x4, fixed_abs, tag = 'smem constant byte address 0x4 - core index']
  #allocation1 [shape = 'u32[144,128]{1,0:T(1,128)}', space=vmem, size = 0x12000, scoped, tag = 'internal scratch']
  #allocation2 [shape = 'f32[8,32]{1,0:T(8,128)}', space=vmem, size = 0x1000, scoped, tag = 'scratch operand']
  #allocation3 [shape = 'f32[8,32]{1,0:T(8,128)}', space=vmem, size = 0x1000, scoped, tag = 'scratch operand']
  %s0 = inlined_call_operand.hbm [shape: f32[8,8,128], index: 0, kind: input, shape index: {}]
  %s1 = inlined_call_operand.vmem [shape: f32[32,128], index: 1, kind: input, shape index: {}]
  %s2 = inlined_call_operand.vmem [shape: f32[32,5], index: 2, kind: input, shape index: {}]
  %s3 = inlined_call_operand.vmem [shape: f32[1,5], index: 3, kind: input, shape index: {}]
  %s4 = inlined_call_operand.hbm [shape: f32[8,5], index: 4, kind: output, shape index: {}]
  %s5 = sld [smem:[#allocation0]]
  $region38: #{tpu_custom_call.1} parent=0
    _
  %s7 = ssub.s32 1, %s5
  %s8 = scalar_select 0, %s7, %s5
  $region1: #{tpu_custom_call.1} parent=0
    #allocation4 [shape = 'u8[32768]{0}', space=vmem, size = 0x8000, scoped, tag = 'input window, operand 0, single buffered']
    #allocation5 [shape = 's32[1]{0}', space=sflag, size = 0x4, scoped, tag = 'scoped memory for tpu_custom_call.1']
    #allocation6 [shape = 's32[1]{0}', space=sflag, size = 0x4, scoped, tag = 'scoped memory for tpu_custom_call.1']
    #allocation7 [shape = 'u8[4096]{0}', space=vmem, size = 0x1000, scoped, tag = 'output window, operand 0, single buffered']
    %9 = vsyncpa [#allocation5], 0
    %10 = vsyncpa [#allocation6], 0
    // Predicated region
    $region2: #{tpu_custom_call.1} parent=1 // pred_check
      _
    $region3: #{tpu_custom_call.1} parent=1 // pred_check_branch
      %12 = sbr.rel (0) target = $region5
    $region4: #{tpu_custom_call.1} parent=1 // pred_region
      %s14 = ssub.s32 1024, 1024
      %15 = vsyncadd [#allocation5], %s14
      %s16 = sshll.u32 [#allocation4], 4
      %s17 = int_to_ptr.vmem [resolvable:$true] %s16
      %22 = dma.hbm_to_vmem [thread:$0]  %s0, 1024, %s17, [#allocation5], 128, 128, 8
    $region5: #{tpu_custom_call.1} parent=1 // pred_fallthru
      _
    // Predicated region
    $region6: #{tpu_custom_call.1} parent=1 // pred_check
      _
    $region7: #{tpu_custom_call.1} parent=1 // pred_check_branch
      %24 = sbr.rel (0) target = $region9
    $region8: #{tpu_custom_call.1} parent=1 // pred_region
      _
    $region9: #{tpu_custom_call.1} parent=1 // pred_fallthru
      _
    // Predicated region
    $region10: #{tpu_custom_call.1} parent=1 // pred_check
      _
    $region11: #{tpu_custom_call.1} parent=1 // pred_check_branch
      %26 = sbr.rel (0) target = $region13
    $region12: #{tpu_custom_call.1} parent=1 // pred_region
      _
    $region13: #{tpu_custom_call.1} parent=1 // pred_fallthru
      _
    // Predicated region
    $region14: #{tpu_custom_call.1} parent=1 // pred_check
      _
    $region15: #{tpu_custom_call.1} parent=1 // pred_check_branch
      %28 = sbr.rel (0) target = $region17
    $region16: #{tpu_custom_call.1} parent=1 // pred_region
      _
    $region17: #{tpu_custom_call.1} parent=1 // pred_fallthru
      _
    // Predicated region
    $region18: #{tpu_custom_call.1} parent=1 // pred_check
      _
    $region19: #{tpu_custom_call.1} parent=1 // pred_check_branch
      %30 = sbr.rel (0) target = $region21
    $region20: #{tpu_custom_call.1} parent=1 // pred_region
      %31 = dma.done [#allocation5], 1024
    $region21: #{tpu_custom_call.1} parent=1 // pred_fallthru
      _
    %p32 = scmp.eq.s32.totalorder 0, 0
    // Predicated region
    $region22: #{tpu_custom_call.1} parent=1 // pred_check
      %p33 = pneg %p32
    $region23: #{tpu_custom_call.1} parent=1 // pred_check_branch
      %35 = sbr.rel (%p33) target = $region25
    $region24: #{tpu_custom_call.1} parent=1 // pred_region
      %vm36 = vcmask 261120
      %37 = vst.msk [vmem:[#allocation2] sm:$0xff] %vm36, 0.0
      %38 = vst.msk [vmem:[#allocation3] sm:$0xff] %vm36, 0.0
    $region25: #{tpu_custom_call.1} parent=1 // pred_fallthru
      _
    %v39 = vld [vmem:[#allocation4] sm:$0xff]
    %v40 = vld [vmem:[#allocation2] sm:$0xff]
    %v41 = vld [vmem:[%s1] sm:$0xff]
    %v42 = vld [vmem:[%s1 + $0x8] sm:$0xff]
    %v43 = vld [vmem:[%s1 + $0x10] sm:$0xff]
    %v44 = vld [vmem:[%s1 + $0x18] sm:$0xff]
    %vm45 = vcmask 261120
    %v47 = vsel %vm45, %v40, 0
    %49 = vmatprep.subr.mxu0 0.0
    %50 = vmatpush1.msra.mxu0 %v41
    %51 = vmatprep.subr.mxu0 0.0
    %52 = vmatpush1.msra.mxu0 %v42
    %53 = vmatprep.subr.mxu0 0.0
    %54 = vmatpush1.msra.mxu0 %v43
    %55 = vmatprep.subr.mxu0 0.0
    %56 = vmatpush1.msra.mxu0 %v44
    %57 = vmatprep.subr.mxu0 0.0
    %58 = vmatpush1.msra.mxu0 0.0
    %59 = vmatprep.subr.mxu0 0.0
    %60 = vmatpush1.msra.mxu0 0.0
    %61 = vmatprep.subr.mxu0 0.0
    %62 = vmatpush1.msra.mxu0 0.0
    %63 = vmatprep.subr.mxu0 0.0
    %64 = vmatpush1.msra.mxu0 0.0
    %65 = vmatprep.subr.mxu0 0.0
    %66 = vmatpush1.msra.mxu0 0.0
    %67 = vmatprep.subr.mxu0 0.0
    %68 = vmatpush1.msra.mxu0 0.0
    %69 = vmatprep.subr.mxu0 0.0
    %70 = vmatpush1.msra.mxu0 0.0
    %71 = vmatprep.subr.mxu0 0.0
    %72 = vmatpush1.msra.mxu0 0.0
    %73 = vmatprep.subr.mxu0 0.0
    %74 = vmatpush1.msra.mxu0 0.0
    %75 = vmatprep.subr.mxu0 0.0
    %76 = vmatpush1.msra.mxu0 0.0
    %77 = vmatprep.subr.mxu0 0.0
    %78 = vmatpush1.msra.mxu0 0.0
    %79 = vmatprep.subr.mxu0 0.0
    %80 = vmatpush1.msra.mxu0 0.0
    %81 = vmatprep.subr.mxu0 0.0
    %82 = vmatpush1.msra.mxu0 0.0
    %83 = vmatprep.subr.mxu0 0.0
    %84 = vmatpush1.msra.mxu0 0.0
    %85 = vmatprep.subr.mxu0 0.0
    %86 = vmatpush1.msra.mxu0 0.0
    %87 = vmatprep.subr.mxu0 0.0
    %88 = vmatpush1.msra.mxu0 0.0
    %89 = vmatprep.subr.mxu0 0.0
    %90 = vmatpush1.msra.mxu0 0.0
    %91 = vmatprep.subr.mxu0 0.0
    %92 = vmatpush1.msra.mxu0 0.0
    %93 = vmatprep.subr.mxu0 0.0
    %94 = vmatpush1.msra.mxu0 0.0
    %95 = vmatprep.subr.mxu0 0.0
    %96 = vmatpush1.msra.mxu0 0.0
    %97 = vmatprep.subr.mxu0 0.0
    %98 = vmatpush1.msra.mxu0 0.0
    %99 = vmatprep.subr.mxu0 0.0
    %100 = vmatpush1.msra.mxu0 0.0
    %101 = vmatprep.subr.mxu0 0.0
    %102 = vmatpush1.msra.mxu0 0.0
    %103 = vmatprep.subr.mxu0 0.0
    %104 = vmatpush1.msra.mxu0 0.0
    %105 = vmatprep.subr.mxu0 0.0
    %106 = vmatpush1.msra.mxu0 0.0
    %107 = vmatprep.subr.mxu0 0.0
    %108 = vmatpush1.msra.mxu0 0.0
    %109 = vmatprep.subr.mxu0 0.0
    %110 = vmatpush1.msra.mxu0 0.0
    %111 = vmatprep.subr.mxu0 0.0
    %112 = vmatpush1.msra.mxu0 0.0
    %113 = vmatprep.mubr.f32.mxu0 0.0
    %114 = vmatmul.mubr.f32.gmra.mrb[0].mxu0 %v47
    %v115 = vpop.f32.mrb[0].mxu0
    %v116 = vadd.f32 0.0, %v115
    %v117 = vpop.f32.mrb[0].mxu0
    %118 = vdwg.mxu0
    %v119 = vadd.f32 %v39, %v116
    %v120 = vxor.u32 %v119, 2147483648
    %v121 = vmul.f32 %v120, 1.442695
    %v122 = vpow.pop %v121
    %v123 = vadd.f32 %v122, 1.0
    %v124 = vrcp.pop %v123
    %v125 = vmul.f32 1.0, %v124
    %v126 = vtanh.pop %v119
    %v127 = vld [vmem:[#allocation3] sm:$0xff]
    %129 = vrot.lane.b32.xlu0 %v127, 32
    %v130 = vpop.permute.xlu0 %129
    %v132 = vmul.f32 %v125, %v130
    %134 = vrot.lane.b32.xlu0 %v126, 64
    %v135 = vpop.permute.xlu0 %134
    %v137 = vmul.f32 %v125, %v135
    %139 = vrot.lane.b32.xlu0 %v137, 32
    %v140 = vpop.permute.xlu0 %139
    %v142 = vadd.f32 %v132, %v140
    %v143 = vtanh.pop %v142
    %145 = vrot.lane.b32.xlu0 %v143, 64
    %v146 = vpop.permute.xlu0 %145
    %v148 = vmul.f32 %v125, %v146
    %150 = vrot.lane.b32.xlu0 %v142, 96
    %v151 = vpop.permute.xlu0 %150
    %153 = vst.msk [vmem:[#allocation3] sm:$0xff] %vm45, %v151
    %155 = vrot.lane.b32.xlu0 %v148, 32
    %v156 = vpop.permute.xlu0 %155
    %158 = vst.msk [vmem:[#allocation2] sm:$0xff] %vm45, %v156
    %s159 = scalar_lea.vmem [#allocation4], 8
    %v160 = vld [vmem:[%s159] sm:$0xff]
    %v161 = vld [vmem:[#allocation2] sm:$0xff]
    %v162 = vld [vmem:[%s1] sm:$0xff]
    %v163 = vld [vmem:[%s1 + $0x8] sm:$0xff]
    %v164 = vld [vmem:[%s1 + $0x10] sm:$0xff]
    %v165 = vld [vmem:[%s1 + $0x18] sm:$0xff]
    %v167 = vsel %vm45, %v161, 0
    %169 = vmatprep.subr.mxu0 0.0
    %170 = vmatpush1.msra.mxu0 %v162
    %171 = vmatprep.subr.mxu0 0.0
    %172 = vmatpush1.msra.mxu0 %v163
    %173 = vmatprep.subr.mxu0 0.0
    %174 = vmatpush1.msra.mxu0 %v164
    %175 = vmatprep.subr.mxu0 0.0
    %176 = vmatpush1.msra.mxu0 %v165
    %177 = vmatprep.subr.mxu0 0.0
    %178 = vmatpush1.msra.mxu0 0.0
    %179 = vmatprep.subr.mxu0 0.0
    %180 = vmatpush1.msra.mxu0 0.0
    %181 = vmatprep.subr.mxu0 0.0
    %182 = vmatpush1.msra.mxu0 0.0
    %183 = vmatprep.subr.mxu0 0.0
    %184 = vmatpush1.msra.mxu0 0.0
    %185 = vmatprep.subr.mxu0 0.0
    %186 = vmatpush1.msra.mxu0 0.0
    %187 = vmatprep.subr.mxu0 0.0
    %188 = vmatpush1.msra.mxu0 0.0
    %189 = vmatprep.subr.mxu0 0.0
    %190 = vmatpush1.msra.mxu0 0.0
    %191 = vmatprep.subr.mxu0 0.0
    %192 = vmatpush1.msra.mxu0 0.0
    %193 = vmatprep.subr.mxu0 0.0
    %194 = vmatpush1.msra.mxu0 0.0
    %195 = vmatprep.subr.mxu0 0.0
    %196 = vmatpush1.msra.mxu0 0.0
    %197 = vmatprep.subr.mxu0 0.0
    %198 = vmatpush1.msra.mxu0 0.0
    %199 = vmatprep.subr.mxu0 0.0
    %200 = vmatpush1.msra.mxu0 0.0
    %201 = vmatprep.subr.mxu0 0.0
    %202 = vmatpush1.msra.mxu0 0.0
    %203 = vmatprep.subr.mxu0 0.0
    %204 = vmatpush1.msra.mxu0 0.0
    %205 = vmatprep.subr.mxu0 0.0
    %206 = vmatpush1.msra.mxu0 0.0
    %207 = vmatprep.subr.mxu0 0.0
    %208 = vmatpush1.msra.mxu0 0.0
    %209 = vmatprep.subr.mxu0 0.0
    %210 = vmatpush1.msra.mxu0 0.0
    %211 = vmatprep.subr.mxu0 0.0
    %212 = vmatpush1.msra.mxu0 0.0
    %213 = vmatprep.subr.mxu0 0.0
    %214 = vmatpush1.msra.mxu0 0.0
    %215 = vmatprep.subr.mxu0 0.0
    %216 = vmatpush1.msra.mxu0 0.0
    %217 = vmatprep.subr.mxu0 0.0
    %218 = vmatpush1.msra.mxu0 0.0
    %219 = vmatprep.subr.mxu0 0.0
    %220 = vmatpush1.msra.mxu0 0.0
    %221 = vmatprep.subr.mxu0 0.0
    %222 = vmatpush1.msra.mxu0 0.0
    %223 = vmatprep.subr.mxu0 0.0
    %224 = vmatpush1.msra.mxu0 0.0
    %225 = vmatprep.subr.mxu0 0.0
    %226 = vmatpush1.msra.mxu0 0.0
    %227 = vmatprep.subr.mxu0 0.0
    %228 = vmatpush1.msra.mxu0 0.0
    %229 = vmatprep.subr.mxu0 0.0
    %230 = vmatpush1.msra.mxu0 0.0
    %231 = vmatprep.subr.mxu0 0.0
    %232 = vmatpush1.msra.mxu0 0.0
    %233 = vmatprep.mubr.f32.mxu0 0.0
    %234 = vmatmul.mubr.f32.gmra.mrb[0].mxu0 %v167
    %v235 = vpop.f32.mrb[0].mxu0
    %v236 = vadd.f32 0.0, %v235
    %v237 = vpop.f32.mrb[0].mxu0
    %238 = vdwg.mxu0
    %v239 = vadd.f32 %v160, %v236
    %v240 = vxor.u32 %v239, 2147483648
    %v241 = vmul.f32 %v240, 1.442695
    %v242 = vpow.pop %v241
    %v243 = vadd.f32 %v242, 1.0
    %v244 = vrcp.pop %v243
    %v245 = vmul.f32 1.0, %v244
    %v246 = vtanh.pop %v239
    %v247 = vld [vmem:[#allocation3] sm:$0xff]
    %249 = vrot.lane.b32.xlu0 %v247, 32
    %v250 = vpop.permute.xlu0 %249
    %v252 = vmul.f32 %v245, %v250
    %254 = vrot.lane.b32.xlu0 %v246, 64
    %v255 = vpop.permute.xlu0 %254
    %v257 = vmul.f32 %v245, %v255
    %259 = vrot.lane.b32.xlu0 %v257, 32
    %v260 = vpop.permute.xlu0 %259
    %v262 = vadd.f32 %v252, %v260
    %v263 = vtanh.pop %v262
    %265 = vrot.lane.b32.xlu0 %v263, 64
    %v266 = vpop.permute.xlu0 %265
    %v268 = vmul.f32 %v245, %v266
    %270 = vrot.lane.b32.xlu0 %v262, 96
    %v271 = vpop.permute.xlu0 %270
    %273 = vst.msk [vmem:[#allocation3] sm:$0xff] %vm45, %v271
    %275 = vrot.lane.b32.xlu0 %v268, 32
    %v276 = vpop.permute.xlu0 %275
    %278 = vst.msk [vmem:[#allocation2] sm:$0xff] %vm45, %v276
    %s279 = scalar_lea.vmem [#allocation4], 16
    %v280 = vld [vmem:[%s279] sm:$0xff]
    %v281 = vld [vmem:[#allocation2] sm:$0xff]
    %v282 = vld [vmem:[%s1] sm:$0xff]
    %v283 = vld [vmem:[%s1 + $0x8] sm:$0xff]
    %v284 = vld [vmem:[%s1 + $0x10] sm:$0xff]
    %v285 = vld [vmem:[%s1 + $0x18] sm:$0xff]
    %v287 = vsel %vm45, %v281, 0
    %289 = vmatprep.subr.mxu0 0.0
    %290 = vmatpush1.msra.mxu0 %v282
    %291 = vmatprep.subr.mxu0 0.0
    %292 = vmatpush1.msra.mxu0 %v283
    %293 = vmatprep.subr.mxu0 0.0
    %294 = vmatpush1.msra.mxu0 %v284
    %295 = vmatprep.subr.mxu0 0.0
    %296 = vmatpush1.msra.mxu0 %v285
    %297 = vmatprep.subr.mxu0 0.0
    %298 = vmatpush1.msra.mxu0 0.0
    %299 = vmatprep.subr.mxu0 0.0
    %300 = vmatpush1.msra.mxu0 0.0
    %301 = vmatprep.subr.mxu0 0.0
    %302 = vmatpush1.msra.mxu0 0.0
    %303 = vmatprep.subr.mxu0 0.0
    %304 = vmatpush1.msra.mxu0 0.0
    %305 = vmatprep.subr.mxu0 0.0
    %306 = vmatpush1.msra.mxu0 0.0
    %307 = vmatprep.subr.mxu0 0.0
    %308 = vmatpush1.msra.mxu0 0.0
    %309 = vmatprep.subr.mxu0 0.0
    %310 = vmatpush1.msra.mxu0 0.0
    %311 = vmatprep.subr.mxu0 0.0
    %312 = vmatpush1.msra.mxu0 0.0
    %313 = vmatprep.subr.mxu0 0.0
    %314 = vmatpush1.msra.mxu0 0.0
    %315 = vmatprep.subr.mxu0 0.0
    %316 = vmatpush1.msra.mxu0 0.0
    %317 = vmatprep.subr.mxu0 0.0
    %318 = vmatpush1.msra.mxu0 0.0
    %319 = vmatprep.subr.mxu0 0.0
    %320 = vmatpush1.msra.mxu0 0.0
    %321 = vmatprep.subr.mxu0 0.0
    %322 = vmatpush1.msra.mxu0 0.0
    %323 = vmatprep.subr.mxu0 0.0
    %324 = vmatpush1.msra.mxu0 0.0
    %325 = vmatprep.subr.mxu0 0.0
    %326 = vmatpush1.msra.mxu0 0.0
    %327 = vmatprep.subr.mxu0 0.0
    %328 = vmatpush1.msra.mxu0 0.0
    %329 = vmatprep.subr.mxu0 0.0
    %330 = vmatpush1.msra.mxu0 0.0
    %331 = vmatprep.subr.mxu0 0.0
    %332 = vmatpush1.msra.mxu0 0.0
    %333 = vmatprep.subr.mxu0 0.0
    %334 = vmatpush1.msra.mxu0 0.0
    %335 = vmatprep.subr.mxu0 0.0
    %336 = vmatpush1.msra.mxu0 0.0
    %337 = vmatprep.subr.mxu0 0.0
    %338 = vmatpush1.msra.mxu0 0.0
    %339 = vmatprep.subr.mxu0 0.0
    %340 = vmatpush1.msra.mxu0 0.0
    %341 = vmatprep.subr.mxu0 0.0
    %342 = vmatpush1.msra.mxu0 0.0
    %343 = vmatprep.subr.mxu0 0.0
    %344 = vmatpush1.msra.mxu0 0.0
    %345 = vmatprep.subr.mxu0 0.0
    %346 = vmatpush1.msra.mxu0 0.0
    %347 = vmatprep.subr.mxu0 0.0
    %348 = vmatpush1.msra.mxu0 0.0
    %349 = vmatprep.subr.mxu0 0.0
    %350 = vmatpush1.msra.mxu0 0.0
    %351 = vmatprep.subr.mxu0 0.0
    %352 = vmatpush1.msra.mxu0 0.0
    %353 = vmatprep.mubr.f32.mxu0 0.0
    %354 = vmatmul.mubr.f32.gmra.mrb[0].mxu0 %v287
    %v355 = vpop.f32.mrb[0].mxu0
    %v356 = vadd.f32 0.0, %v355
    %v357 = vpop.f32.mrb[0].mxu0
    %358 = vdwg.mxu0
    %v359 = vadd.f32 %v280, %v356
    %v360 = vxor.u32 %v359, 2147483648
    %v361 = vmul.f32 %v360, 1.442695
    %v362 = vpow.pop %v361
    %v363 = vadd.f32 %v362, 1.0
    %v364 = vrcp.pop %v363
    %v365 = vmul.f32 1.0, %v364
    %v366 = vtanh.pop %v359
    %v367 = vld [vmem:[#allocation3] sm:$0xff]
    %369 = vrot.lane.b32.xlu0 %v367, 32
    %v370 = vpop.permute.xlu0 %369
    %v372 = vmul.f32 %v365, %v370
    %374 = vrot.lane.b32.xlu0 %v366, 64
    %v375 = vpop.permute.xlu0 %374
    %v377 = vmul.f32 %v365, %v375
    %379 = vrot.lane.b32.xlu0 %v377, 32
    %v380 = vpop.permute.xlu0 %379
    %v382 = vadd.f32 %v372, %v380
    %v383 = vtanh.pop %v382
    %385 = vrot.lane.b32.xlu0 %v383, 64
    %v386 = vpop.permute.xlu0 %385
    %v388 = vmul.f32 %v365, %v386
    %390 = vrot.lane.b32.xlu0 %v382, 96
    %v391 = vpop.permute.xlu0 %390
    %393 = vst.msk [vmem:[#allocation3] sm:$0xff] %vm45, %v391
    %395 = vrot.lane.b32.xlu0 %v388, 32
    %v396 = vpop.permute.xlu0 %395
    %398 = vst.msk [vmem:[#allocation2] sm:$0xff] %vm45, %v396
    %s399 = scalar_lea.vmem [#allocation4], 24
    %v400 = vld [vmem:[%s399] sm:$0xff]
    %v401 = vld [vmem:[#allocation2] sm:$0xff]
    %v402 = vld [vmem:[%s1] sm:$0xff]
    %v403 = vld [vmem:[%s1 + $0x8] sm:$0xff]
    %v404 = vld [vmem:[%s1 + $0x10] sm:$0xff]
    %v405 = vld [vmem:[%s1 + $0x18] sm:$0xff]
    %v407 = vsel %vm45, %v401, 0
    %409 = vmatprep.subr.mxu0 0.0
    %410 = vmatpush1.msra.mxu0 %v402
    %411 = vmatprep.subr.mxu0 0.0
    %412 = vmatpush1.msra.mxu0 %v403
    %413 = vmatprep.subr.mxu0 0.0
    %414 = vmatpush1.msra.mxu0 %v404
    %415 = vmatprep.subr.mxu0 0.0
    %416 = vmatpush1.msra.mxu0 %v405
    %417 = vmatprep.subr.mxu0 0.0
    %418 = vmatpush1.msra.mxu0 0.0
    %419 = vmatprep.subr.mxu0 0.0
    %420 = vmatpush1.msra.mxu0 0.0
    %421 = vmatprep.subr.mxu0 0.0
    %422 = vmatpush1.msra.mxu0 0.0
    %423 = vmatprep.subr.mxu0 0.0
    %424 = vmatpush1.msra.mxu0 0.0
    %425 = vmatprep.subr.mxu0 0.0
    %426 = vmatpush1.msra.mxu0 0.0
    %427 = vmatprep.subr.mxu0 0.0
    %428 = vmatpush1.msra.mxu0 0.0
    %429 = vmatprep.subr.mxu0 0.0
    %430 = vmatpush1.msra.mxu0 0.0
    %431 = vmatprep.subr.mxu0 0.0
    %432 = vmatpush1.msra.mxu0 0.0
    %433 = vmatprep.subr.mxu0 0.0
    %434 = vmatpush1.msra.mxu0 0.0
    %435 = vmatprep.subr.mxu0 0.0
    %436 = vmatpush1.msra.mxu0 0.0
    %437 = vmatprep.subr.mxu0 0.0
    %438 = vmatpush1.msra.mxu0 0.0
    %439 = vmatprep.subr.mxu0 0.0
    %440 = vmatpush1.msra.mxu0 0.0
    %441 = vmatprep.subr.mxu0 0.0
    %442 = vmatpush1.msra.mxu0 0.0
    %443 = vmatprep.subr.mxu0 0.0
    %444 = vmatpush1.msra.mxu0 0.0
    %445 = vmatprep.subr.mxu0 0.0
    %446 = vmatpush1.msra.mxu0 0.0
    %447 = vmatprep.subr.mxu0 0.0
    %448 = vmatpush1.msra.mxu0 0.0
    %449 = vmatprep.subr.mxu0 0.0
    %450 = vmatpush1.msra.mxu0 0.0
    %451 = vmatprep.subr.mxu0 0.0
    %452 = vmatpush1.msra.mxu0 0.0
    %453 = vmatprep.subr.mxu0 0.0
    %454 = vmatpush1.msra.mxu0 0.0
    %455 = vmatprep.subr.mxu0 0.0
    %456 = vmatpush1.msra.mxu0 0.0
    %457 = vmatprep.subr.mxu0 0.0
    %458 = vmatpush1.msra.mxu0 0.0
    %459 = vmatprep.subr.mxu0 0.0
    %460 = vmatpush1.msra.mxu0 0.0
    %461 = vmatprep.subr.mxu0 0.0
    %462 = vmatpush1.msra.mxu0 0.0
    %463 = vmatprep.subr.mxu0 0.0
    %464 = vmatpush1.msra.mxu0 0.0
    %465 = vmatprep.subr.mxu0 0.0
    %466 = vmatpush1.msra.mxu0 0.0
    %467 = vmatprep.subr.mxu0 0.0
    %468 = vmatpush1.msra.mxu0 0.0
    %469 = vmatprep.subr.mxu0 0.0
    %470 = vmatpush1.msra.mxu0 0.0
    %471 = vmatprep.subr.mxu0 0.0
    %472 = vmatpush1.msra.mxu0 0.0
    %473 = vmatprep.mubr.f32.mxu0 0.0
    %474 = vmatmul.mubr.f32.gmra.mrb[0].mxu0 %v407
    %v475 = vpop.f32.mrb[0].mxu0
    %v476 = vadd.f32 0.0, %v475
    %v477 = vpop.f32.mrb[0].mxu0
    %478 = vdwg.mxu0
    %v479 = vadd.f32 %v400, %v476
    %v480 = vxor.u32 %v479, 2147483648
    %v481 = vmul.f32 %v480, 1.442695
    %v482 = vpow.pop %v481
    %v483 = vadd.f32 %v482, 1.0
    %v484 = vrcp.pop %v483
    %v485 = vmul.f32 1.0, %v484
    %v486 = vtanh.pop %v479
    %v487 = vld [vmem:[#allocation3] sm:$0xff]
    %489 = vrot.lane.b32.xlu0 %v487, 32
    %v490 = vpop.permute.xlu0 %489
    %v492 = vmul.f32 %v485, %v490
    %494 = vrot.lane.b32.xlu0 %v486, 64
    %v495 = vpop.permute.xlu0 %494
    %v497 = vmul.f32 %v485, %v495
    %499 = vrot.lane.b32.xlu0 %v497, 32
    %v500 = vpop.permute.xlu0 %499
    %v502 = vadd.f32 %v492, %v500
    %v503 = vtanh.pop %v502
    %505 = vrot.lane.b32.xlu0 %v503, 64
    %v506 = vpop.permute.xlu0 %505
    %v508 = vmul.f32 %v485, %v506
    %510 = vrot.lane.b32.xlu0 %v502, 96
    %v511 = vpop.permute.xlu0 %510
    %513 = vst.msk [vmem:[#allocation3] sm:$0xff] %vm45, %v511
    %515 = vrot.lane.b32.xlu0 %v508, 32
    %v516 = vpop.permute.xlu0 %515
    %518 = vst.msk [vmem:[#allocation2] sm:$0xff] %vm45, %v516
    %s519 = scalar_lea.vmem [#allocation4], 32
    %v520 = vld [vmem:[%s519] sm:$0xff]
    %v521 = vld [vmem:[#allocation2] sm:$0xff]
    %v522 = vld [vmem:[%s1] sm:$0xff]
    %v523 = vld [vmem:[%s1 + $0x8] sm:$0xff]
    %v524 = vld [vmem:[%s1 + $0x10] sm:$0xff]
    %v525 = vld [vmem:[%s1 + $0x18] sm:$0xff]
    %v527 = vsel %vm45, %v521, 0
    %529 = vmatprep.subr.mxu0 0.0
    %530 = vmatpush1.msra.mxu0 %v522
    %531 = vmatprep.subr.mxu0 0.0
    %532 = vmatpush1.msra.mxu0 %v523
    %533 = vmatprep.subr.mxu0 0.0
    %534 = vmatpush1.msra.mxu0 %v524
    %535 = vmatprep.subr.mxu0 0.0
    %536 = vmatpush1.msra.mxu0 %v525
    %537 = vmatprep.subr.mxu0 0.0
    %538 = vmatpush1.msra.mxu0 0.0
    %539 = vmatprep.subr.mxu0 0.0
    %540 = vmatpush1.msra.mxu0 0.0
    %541 = vmatprep.subr.mxu0 0.0
    %542 = vmatpush1.msra.mxu0 0.0
    %543 = vmatprep.subr.mxu0 0.0
    %544 = vmatpush1.msra.mxu0 0.0
    %545 = vmatprep.subr.mxu0 0.0
    %546 = vmatpush1.msra.mxu0 0.0
    %547 = vmatprep.subr.mxu0 0.0
    %548 = vmatpush1.msra.mxu0 0.0
    %549 = vmatprep.subr.mxu0 0.0
    %550 = vmatpush1.msra.mxu0 0.0
    %551 = vmatprep.subr.mxu0 0.0
    %552 = vmatpush1.msra.mxu0 0.0
    %553 = vmatprep.subr.mxu0 0.0
    %554 = vmatpush1.msra.mxu0 0.0
    %555 = vmatprep.subr.mxu0 0.0
    %556 = vmatpush1.msra.mxu0 0.0
    %557 = vmatprep.subr.mxu0 0.0
    %558 = vmatpush1.msra.mxu0 0.0
    %559 = vmatprep.subr.mxu0 0.0
    %560 = vmatpush1.msra.mxu0 0.0
    %561 = vmatprep.subr.mxu0 0.0
    %562 = vmatpush1.msra.mxu0 0.0
    %563 = vmatprep.subr.mxu0 0.0
    %564 = vmatpush1.msra.mxu0 0.0
    %565 = vmatprep.subr.mxu0 0.0
    %566 = vmatpush1.msra.mxu0 0.0
    %567 = vmatprep.subr.mxu0 0.0
    %568 = vmatpush1.msra.mxu0 0.0
    %569 = vmatprep.subr.mxu0 0.0
    %570 = vmatpush1.msra.mxu0 0.0
    %571 = vmatprep.subr.mxu0 0.0
    %572 = vmatpush1.msra.mxu0 0.0
    %573 = vmatprep.subr.mxu0 0.0
    %574 = vmatpush1.msra.mxu0 0.0
    %575 = vmatprep.subr.mxu0 0.0
    %576 = vmatpush1.msra.mxu0 0.0
    %577 = vmatprep.subr.mxu0 0.0
    %578 = vmatpush1.msra.mxu0 0.0
    %579 = vmatprep.subr.mxu0 0.0
    %580 = vmatpush1.msra.mxu0 0.0
    %581 = vmatprep.subr.mxu0 0.0
    %582 = vmatpush1.msra.mxu0 0.0
    %583 = vmatprep.subr.mxu0 0.0
    %584 = vmatpush1.msra.mxu0 0.0
    %585 = vmatprep.subr.mxu0 0.0
    %586 = vmatpush1.msra.mxu0 0.0
    %587 = vmatprep.subr.mxu0 0.0
    %588 = vmatpush1.msra.mxu0 0.0
    %589 = vmatprep.subr.mxu0 0.0
    %590 = vmatpush1.msra.mxu0 0.0
    %591 = vmatprep.subr.mxu0 0.0
    %592 = vmatpush1.msra.mxu0 0.0
    %593 = vmatprep.mubr.f32.mxu0 0.0
    %594 = vmatmul.mubr.f32.gmra.mrb[0].mxu0 %v527
    %v595 = vpop.f32.mrb[0].mxu0
    %v596 = vadd.f32 0.0, %v595
    %v597 = vpop.f32.mrb[0].mxu0
    %598 = vdwg.mxu0
    %v599 = vadd.f32 %v520, %v596
    %v600 = vxor.u32 %v599, 2147483648
    %v601 = vmul.f32 %v600, 1.442695
    %v602 = vpow.pop %v601
    %v603 = vadd.f32 %v602, 1.0
    %v604 = vrcp.pop %v603
    %v605 = vmul.f32 1.0, %v604
    %v606 = vtanh.pop %v599
    %v607 = vld [vmem:[#allocation3] sm:$0xff]
    %609 = vrot.lane.b32.xlu0 %v607, 32
    %v610 = vpop.permute.xlu0 %609
    %v612 = vmul.f32 %v605, %v610
    %614 = vrot.lane.b32.xlu0 %v606, 64
    %v615 = vpop.permute.xlu0 %614
    %v617 = vmul.f32 %v605, %v615
    %619 = vrot.lane.b32.xlu0 %v617, 32
    %v620 = vpop.permute.xlu0 %619
    %v622 = vadd.f32 %v612, %v620
    %v623 = vtanh.pop %v622
    %625 = vrot.lane.b32.xlu0 %v623, 64
    %v626 = vpop.permute.xlu0 %625
    %v628 = vmul.f32 %v605, %v626
    %630 = vrot.lane.b32.xlu0 %v622, 96
    %v631 = vpop.permute.xlu0 %630
    %633 = vst.msk [vmem:[#allocation3] sm:$0xff] %vm45, %v631
    %635 = vrot.lane.b32.xlu0 %v628, 32
    %v636 = vpop.permute.xlu0 %635
    %638 = vst.msk [vmem:[#allocation2] sm:$0xff] %vm45, %v636
    %s639 = scalar_lea.vmem [#allocation4], 40
    %v640 = vld [vmem:[%s639] sm:$0xff]
    %v641 = vld [vmem:[#allocation2] sm:$0xff]
    %v642 = vld [vmem:[%s1] sm:$0xff]
    %v643 = vld [vmem:[%s1 + $0x8] sm:$0xff]
    %v644 = vld [vmem:[%s1 + $0x10] sm:$0xff]
    %v645 = vld [vmem:[%s1 + $0x18] sm:$0xff]
    %v647 = vsel %vm45, %v641, 0
    %649 = vmatprep.subr.mxu0 0.0
    %650 = vmatpush1.msra.mxu0 %v642
    %651 = vmatprep.subr.mxu0 0.0
    %652 = vmatpush1.msra.mxu0 %v643
    %653 = vmatprep.subr.mxu0 0.0
    %654 = vmatpush1.msra.mxu0 %v644
    %655 = vmatprep.subr.mxu0 0.0
    %656 = vmatpush1.msra.mxu0 %v645
    %657 = vmatprep.subr.mxu0 0.0
    %658 = vmatpush1.msra.mxu0 0.0
    %659 = vmatprep.subr.mxu0 0.0
    %660 = vmatpush1.msra.mxu0 0.0
    %661 = vmatprep.subr.mxu0 0.0
    %662 = vmatpush1.msra.mxu0 0.0
    %663 = vmatprep.subr.mxu0 0.0
    %664 = vmatpush1.msra.mxu0 0.0
    %665 = vmatprep.subr.mxu0 0.0
    %666 = vmatpush1.msra.mxu0 0.0
    %667 = vmatprep.subr.mxu0 0.0
    %668 = vmatpush1.msra.mxu0 0.0
    %669 = vmatprep.subr.mxu0 0.0
    %670 = vmatpush1.msra.mxu0 0.0
    %671 = vmatprep.subr.mxu0 0.0
    %672 = vmatpush1.msra.mxu0 0.0
    %673 = vmatprep.subr.mxu0 0.0
    %674 = vmatpush1.msra.mxu0 0.0
    %675 = vmatprep.subr.mxu0 0.0
    %676 = vmatpush1.msra.mxu0 0.0
    %677 = vmatprep.subr.mxu0 0.0
    %678 = vmatpush1.msra.mxu0 0.0
    %679 = vmatprep.subr.mxu0 0.0
    %680 = vmatpush1.msra.mxu0 0.0
    %681 = vmatprep.subr.mxu0 0.0
    %682 = vmatpush1.msra.mxu0 0.0
    %683 = vmatprep.subr.mxu0 0.0
    %684 = vmatpush1.msra.mxu0 0.0
    %685 = vmatprep.subr.mxu0 0.0
    %686 = vmatpush1.msra.mxu0 0.0
    %687 = vmatprep.subr.mxu0 0.0
    %688 = vmatpush1.msra.mxu0 0.0
    %689 = vmatprep.subr.mxu0 0.0
    %690 = vmatpush1.msra.mxu0 0.0
    %691 = vmatprep.subr.mxu0 0.0
    %692 = vmatpush1.msra.mxu0 0.0
    %693 = vmatprep.subr.mxu0 0.0
    %694 = vmatpush1.msra.mxu0 0.0
    %695 = vmatprep.subr.mxu0 0.0
    %696 = vmatpush1.msra.mxu0 0.0
    %697 = vmatprep.subr.mxu0 0.0
    %698 = vmatpush1.msra.mxu0 0.0
    %699 = vmatprep.subr.mxu0 0.0
    %700 = vmatpush1.msra.mxu0 0.0
    %701 = vmatprep.subr.mxu0 0.0
    %702 = vmatpush1.msra.mxu0 0.0
    %703 = vmatprep.subr.mxu0 0.0
    %704 = vmatpush1.msra.mxu0 0.0
    %705 = vmatprep.subr.mxu0 0.0
    %706 = vmatpush1.msra.mxu0 0.0
    %707 = vmatprep.subr.mxu0 0.0
    %708 = vmatpush1.msra.mxu0 0.0
    %709 = vmatprep.subr.mxu0 0.0
    %710 = vmatpush1.msra.mxu0 0.0
    %711 = vmatprep.subr.mxu0 0.0
    %712 = vmatpush1.msra.mxu0 0.0
    %713 = vmatprep.mubr.f32.mxu0 0.0
    %714 = vmatmul.mubr.f32.gmra.mrb[0].mxu0 %v647
    %v715 = vpop.f32.mrb[0].mxu0
    %v716 = vadd.f32 0.0, %v715
    %v717 = vpop.f32.mrb[0].mxu0
    %718 = vdwg.mxu0
    %v719 = vadd.f32 %v640, %v716
    %v720 = vxor.u32 %v719, 2147483648
    %v721 = vmul.f32 %v720, 1.442695
    %v722 = vpow.pop %v721
    %v723 = vadd.f32 %v722, 1.0
    %v724 = vrcp.pop %v723
    %v725 = vmul.f32 1.0, %v724
    %v726 = vtanh.pop %v719
    %v727 = vld [vmem:[#allocation3] sm:$0xff]
    %729 = vrot.lane.b32.xlu0 %v727, 32
    %v730 = vpop.permute.xlu0 %729
    %v732 = vmul.f32 %v725, %v730
    %734 = vrot.lane.b32.xlu0 %v726, 64
    %v735 = vpop.permute.xlu0 %734
    %v737 = vmul.f32 %v725, %v735
    %739 = vrot.lane.b32.xlu0 %v737, 32
    %v740 = vpop.permute.xlu0 %739
    %v742 = vadd.f32 %v732, %v740
    %v743 = vtanh.pop %v742
    %745 = vrot.lane.b32.xlu0 %v743, 64
    %v746 = vpop.permute.xlu0 %745
    %v748 = vmul.f32 %v725, %v746
    %750 = vrot.lane.b32.xlu0 %v742, 96
    %v751 = vpop.permute.xlu0 %750
    %753 = vst.msk [vmem:[#allocation3] sm:$0xff] %vm45, %v751
    %755 = vrot.lane.b32.xlu0 %v748, 32
    %v756 = vpop.permute.xlu0 %755
    %758 = vst.msk [vmem:[#allocation2] sm:$0xff] %vm45, %v756
    %s759 = scalar_lea.vmem [#allocation4], 48
    %v760 = vld [vmem:[%s759] sm:$0xff]
    %v761 = vld [vmem:[#allocation2] sm:$0xff]
    %v762 = vld [vmem:[%s1] sm:$0xff]
    %v763 = vld [vmem:[%s1 + $0x8] sm:$0xff]
    %v764 = vld [vmem:[%s1 + $0x10] sm:$0xff]
    %v765 = vld [vmem:[%s1 + $0x18] sm:$0xff]
    %v767 = vsel %vm45, %v761, 0
    %769 = vmatprep.subr.mxu0 0.0
    %770 = vmatpush1.msra.mxu0 %v762
    %771 = vmatprep.subr.mxu0 0.0
    %772 = vmatpush1.msra.mxu0 %v763
    %773 = vmatprep.subr.mxu0 0.0
    %774 = vmatpush1.msra.mxu0 %v764
    %775 = vmatprep.subr.mxu0 0.0
    %776 = vmatpush1.msra.mxu0 %v765
    %777 = vmatprep.subr.mxu0 0.0
    %778 = vmatpush1.msra.mxu0 0.0
    %779 = vmatprep.subr.mxu0 0.0
    %780 = vmatpush1.msra.mxu0 0.0
    %781 = vmatprep.subr.mxu0 0.0
    %782 = vmatpush1.msra.mxu0 0.0
    %783 = vmatprep.subr.mxu0 0.0
    %784 = vmatpush1.msra.mxu0 0.0
    %785 = vmatprep.subr.mxu0 0.0
    %786 = vmatpush1.msra.mxu0 0.0
    %787 = vmatprep.subr.mxu0 0.0
    %788 = vmatpush1.msra.mxu0 0.0
    %789 = vmatprep.subr.mxu0 0.0
    %790 = vmatpush1.msra.mxu0 0.0
    %791 = vmatprep.subr.mxu0 0.0
    %792 = vmatpush1.msra.mxu0 0.0
    %793 = vmatprep.subr.mxu0 0.0
    %794 = vmatpush1.msra.mxu0 0.0
    %795 = vmatprep.subr.mxu0 0.0
    %796 = vmatpush1.msra.mxu0 0.0
    %797 = vmatprep.subr.mxu0 0.0
    %798 = vmatpush1.msra.mxu0 0.0
    %799 = vmatprep.subr.mxu0 0.0
    %800 = vmatpush1.msra.mxu0 0.0
    %801 = vmatprep.subr.mxu0 0.0
    %802 = vmatpush1.msra.mxu0 0.0
    %803 = vmatprep.subr.mxu0 0.0
    %804 = vmatpush1.msra.mxu0 0.0
    %805 = vmatprep.subr.mxu0 0.0
    %806 = vmatpush1.msra.mxu0 0.0
    %807 = vmatprep.subr.mxu0 0.0
    %808 = vmatpush1.msra.mxu0 0.0
    %809 = vmatprep.subr.mxu0 0.0
    %810 = vmatpush1.msra.mxu0 0.0
    %811 = vmatprep.subr.mxu0 0.0
    %812 = vmatpush1.msra.mxu0 0.0
    %813 = vmatprep.subr.mxu0 0.0
    %814 = vmatpush1.msra.mxu0 0.0
    %815 = vmatprep.subr.mxu0 0.0
    %816 = vmatpush1.msra.mxu0 0.0
    %817 = vmatprep.subr.mxu0 0.0
    %818 = vmatpush1.msra.mxu0 0.0
    %819 = vmatprep.subr.mxu0 0.0
    %820 = vmatpush1.msra.mxu0 0.0
    %821 = vmatprep.subr.mxu0 0.0
    %822 = vmatpush1.msra.mxu0 0.0
    %823 = vmatprep.subr.mxu0 0.0
    %824 = vmatpush1.msra.mxu0 0.0
    %825 = vmatprep.subr.mxu0 0.0
    %826 = vmatpush1.msra.mxu0 0.0
    %827 = vmatprep.subr.mxu0 0.0
    %828 = vmatpush1.msra.mxu0 0.0
    %829 = vmatprep.subr.mxu0 0.0
    %830 = vmatpush1.msra.mxu0 0.0
    %831 = vmatprep.subr.mxu0 0.0
    %832 = vmatpush1.msra.mxu0 0.0
    %833 = vmatprep.mubr.f32.mxu0 0.0
    %834 = vmatmul.mubr.f32.gmra.mrb[0].mxu0 %v767
    %v835 = vpop.f32.mrb[0].mxu0
    %v836 = vadd.f32 0.0, %v835
    %v837 = vpop.f32.mrb[0].mxu0
    %838 = vdwg.mxu0
    %v839 = vadd.f32 %v760, %v836
    %v840 = vxor.u32 %v839, 2147483648
    %v841 = vmul.f32 %v840, 1.442695
    %v842 = vpow.pop %v841
    %v843 = vadd.f32 %v842, 1.0
    %v844 = vrcp.pop %v843
    %v845 = vmul.f32 1.0, %v844
    %v846 = vtanh.pop %v839
    %v847 = vld [vmem:[#allocation3] sm:$0xff]
    %849 = vrot.lane.b32.xlu0 %v847, 32
    %v850 = vpop.permute.xlu0 %849
    %v852 = vmul.f32 %v845, %v850
    %854 = vrot.lane.b32.xlu0 %v846, 64
    %v855 = vpop.permute.xlu0 %854
    %v857 = vmul.f32 %v845, %v855
    %859 = vrot.lane.b32.xlu0 %v857, 32
    %v860 = vpop.permute.xlu0 %859
    %v862 = vadd.f32 %v852, %v860
    %v863 = vtanh.pop %v862
    %865 = vrot.lane.b32.xlu0 %v863, 64
    %v866 = vpop.permute.xlu0 %865
    %v868 = vmul.f32 %v845, %v866
    %870 = vrot.lane.b32.xlu0 %v862, 96
    %v871 = vpop.permute.xlu0 %870
    %873 = vst.msk [vmem:[#allocation3] sm:$0xff] %vm45, %v871
    %875 = vrot.lane.b32.xlu0 %v868, 32
    %v876 = vpop.permute.xlu0 %875
    %878 = vst.msk [vmem:[#allocation2] sm:$0xff] %vm45, %v876
    %s879 = scalar_lea.vmem [#allocation4], 56
    %v880 = vld [vmem:[%s879] sm:$0xff]
    %v881 = vld [vmem:[#allocation2] sm:$0xff]
    %v882 = vld [vmem:[%s1] sm:$0xff]
    %v883 = vld [vmem:[%s1 + $0x8] sm:$0xff]
    %v884 = vld [vmem:[%s1 + $0x10] sm:$0xff]
    %v885 = vld [vmem:[%s1 + $0x18] sm:$0xff]
    %v887 = vsel %vm45, %v881, 0
    %889 = vmatprep.subr.mxu0 0.0
    %890 = vmatpush1.msra.mxu0 %v882
    %891 = vmatprep.subr.mxu0 0.0
    %892 = vmatpush1.msra.mxu0 %v883
    %893 = vmatprep.subr.mxu0 0.0
    %894 = vmatpush1.msra.mxu0 %v884
    %895 = vmatprep.subr.mxu0 0.0
    %896 = vmatpush1.msra.mxu0 %v885
    %897 = vmatprep.subr.mxu0 0.0
    %898 = vmatpush1.msra.mxu0 0.0
    %899 = vmatprep.subr.mxu0 0.0
    %900 = vmatpush1.msra.mxu0 0.0
    %901 = vmatprep.subr.mxu0 0.0
    %902 = vmatpush1.msra.mxu0 0.0
    %903 = vmatprep.subr.mxu0 0.0
    %904 = vmatpush1.msra.mxu0 0.0
    %905 = vmatprep.subr.mxu0 0.0
    %906 = vmatpush1.msra.mxu0 0.0
    %907 = vmatprep.subr.mxu0 0.0
    %908 = vmatpush1.msra.mxu0 0.0
    %909 = vmatprep.subr.mxu0 0.0
    %910 = vmatpush1.msra.mxu0 0.0
    %911 = vmatprep.subr.mxu0 0.0
    %912 = vmatpush1.msra.mxu0 0.0
    %913 = vmatprep.subr.mxu0 0.0
    %914 = vmatpush1.msra.mxu0 0.0
    %915 = vmatprep.subr.mxu0 0.0
    %916 = vmatpush1.msra.mxu0 0.0
    %917 = vmatprep.subr.mxu0 0.0
    %918 = vmatpush1.msra.mxu0 0.0
    %919 = vmatprep.subr.mxu0 0.0
    %920 = vmatpush1.msra.mxu0 0.0
    %921 = vmatprep.subr.mxu0 0.0
    %922 = vmatpush1.msra.mxu0 0.0
    %923 = vmatprep.subr.mxu0 0.0
    %924 = vmatpush1.msra.mxu0 0.0
    %925 = vmatprep.subr.mxu0 0.0
    %926 = vmatpush1.msra.mxu0 0.0
    %927 = vmatprep.subr.mxu0 0.0
    %928 = vmatpush1.msra.mxu0 0.0
    %929 = vmatprep.subr.mxu0 0.0
    %930 = vmatpush1.msra.mxu0 0.0
    %931 = vmatprep.subr.mxu0 0.0
    %932 = vmatpush1.msra.mxu0 0.0
    %933 = vmatprep.subr.mxu0 0.0
    %934 = vmatpush1.msra.mxu0 0.0
    %935 = vmatprep.subr.mxu0 0.0
    %936 = vmatpush1.msra.mxu0 0.0
    %937 = vmatprep.subr.mxu0 0.0
    %938 = vmatpush1.msra.mxu0 0.0
    %939 = vmatprep.subr.mxu0 0.0
    %940 = vmatpush1.msra.mxu0 0.0
    %941 = vmatprep.subr.mxu0 0.0
    %942 = vmatpush1.msra.mxu0 0.0
    %943 = vmatprep.subr.mxu0 0.0
    %944 = vmatpush1.msra.mxu0 0.0
    %945 = vmatprep.subr.mxu0 0.0
    %946 = vmatpush1.msra.mxu0 0.0
    %947 = vmatprep.subr.mxu0 0.0
    %948 = vmatpush1.msra.mxu0 0.0
    %949 = vmatprep.subr.mxu0 0.0
    %950 = vmatpush1.msra.mxu0 0.0
    %951 = vmatprep.subr.mxu0 0.0
    %952 = vmatpush1.msra.mxu0 0.0
    %953 = vmatprep.mubr.f32.mxu0 0.0
    %954 = vmatmul.mubr.f32.gmra.mrb[0].mxu0 %v887
    %v955 = vpop.f32.mrb[0].mxu0
    %v956 = vadd.f32 0.0, %v955
    %v957 = vpop.f32.mrb[0].mxu0
    %958 = vdwg.mxu0
    %v959 = vadd.f32 %v880, %v956
    %v960 = vxor.u32 %v959, 2147483648
    %v961 = vmul.f32 %v960, 1.442695
    %v962 = vpow.pop %v961
    %v963 = vadd.f32 %v962, 1.0
    %v964 = vrcp.pop %v963
    %v965 = vmul.f32 1.0, %v964
    %v966 = vtanh.pop %v959
    %v967 = vld [vmem:[#allocation3] sm:$0xff]
    %969 = vrot.lane.b32.xlu0 %v967, 32
    %v970 = vpop.permute.xlu0 %969
    %v972 = vmul.f32 %v965, %v970
    %974 = vrot.lane.b32.xlu0 %v966, 64
    %v975 = vpop.permute.xlu0 %974
    %v977 = vmul.f32 %v965, %v975
    %979 = vrot.lane.b32.xlu0 %v977, 32
    %v980 = vpop.permute.xlu0 %979
    %v982 = vadd.f32 %v972, %v980
    %v983 = vtanh.pop %v982
    %985 = vrot.lane.b32.xlu0 %v983, 64
    %v986 = vpop.permute.xlu0 %985
    %v988 = vmul.f32 %v965, %v986
    %990 = vrot.lane.b32.xlu0 %v982, 96
    %v991 = vpop.permute.xlu0 %990
    %993 = vst.msk [vmem:[#allocation3] sm:$0xff] %vm45, %v991
    %995 = vrot.lane.b32.xlu0 %v988, 32
    %v996 = vpop.permute.xlu0 %995
    %998 = vst.msk [vmem:[#allocation2] sm:$0xff] %vm45, %v996
    // Predicated region
    $region26: #{tpu_custom_call.1} parent=1 // pred_check
      %p999 = pneg %p32
    $region27: #{tpu_custom_call.1} parent=1 // pred_check_branch
      %1001 = sbr.rel (%p999) target = $region29
    $region28: #{tpu_custom_call.1} parent=1 // pred_region
      %v1002 = vld [vmem:[#allocation2] sm:$0xff]
      %v1003 = vld [vmem:[%s2] sm:$0xff]
      %v1004 = vld [vmem:[%s2 + $0x8] sm:$0xff]
      %v1005 = vld [vmem:[%s2 + $0x10] sm:$0xff]
      %v1006 = vld [vmem:[%s2 + $0x18] sm:$0xff]
      %v1007 = vld [vmem:[%s3] sm:$0x1]
      %v1009 = vlaneseq
      %v1010 = vshrl.u32 %v1009, 7
      %v1011 = vsub.s32 0, %v1010
      %v1012 = vrot.slane %v1007, %v1011
      %v1015 = vsel %vm45, %v1002, 0
      %1017 = vmatprep.subr.mxu0 0.0
      %1018 = vmatpush1.msra.mxu0 %v1003
      %1019 = vmatprep.subr.mxu0 0.0
      %1020 = vmatpush1.msra.mxu0 %v1004
      %1021 = vmatprep.subr.mxu0 0.0
      %1022 = vmatpush1.msra.mxu0 %v1005
      %1023 = vmatprep.subr.mxu0 0.0
      %1024 = vmatpush1.msra.mxu0 %v1006
      %1025 = vmatprep.subr.mxu0 0.0
      %1026 = vmatpush1.msra.mxu0 0.0
      %1027 = vmatprep.subr.mxu0 0.0
      %1028 = vmatpush1.msra.mxu0 0.0
      %1029 = vmatprep.subr.mxu0 0.0
      %1030 = vmatpush1.msra.mxu0 0.0
      %1031 = vmatprep.subr.mxu0 0.0
      %1032 = vmatpush1.msra.mxu0 0.0
      %1033 = vmatprep.subr.mxu0 0.0
      %1034 = vmatpush1.msra.mxu0 0.0
      %1035 = vmatprep.subr.mxu0 0.0
      %1036 = vmatpush1.msra.mxu0 0.0
      %1037 = vmatprep.subr.mxu0 0.0
      %1038 = vmatpush1.msra.mxu0 0.0
      %1039 = vmatprep.subr.mxu0 0.0
      %1040 = vmatpush1.msra.mxu0 0.0
      %1041 = vmatprep.subr.mxu0 0.0
      %1042 = vmatpush1.msra.mxu0 0.0
      %1043 = vmatprep.subr.mxu0 0.0
      %1044 = vmatpush1.msra.mxu0 0.0
      %1045 = vmatprep.subr.mxu0 0.0
      %1046 = vmatpush1.msra.mxu0 0.0
      %1047 = vmatprep.subr.mxu0 0.0
      %1048 = vmatpush1.msra.mxu0 0.0
      %1049 = vmatprep.subr.mxu0 0.0
      %1050 = vmatpush1.msra.mxu0 0.0
      %1051 = vmatprep.subr.mxu0 0.0
      %1052 = vmatpush1.msra.mxu0 0.0
      %1053 = vmatprep.subr.mxu0 0.0
      %1054 = vmatpush1.msra.mxu0 0.0
      %1055 = vmatprep.subr.mxu0 0.0
      %1056 = vmatpush1.msra.mxu0 0.0
      %1057 = vmatprep.subr.mxu0 0.0
      %1058 = vmatpush1.msra.mxu0 0.0
      %1059 = vmatprep.subr.mxu0 0.0
      %1060 = vmatpush1.msra.mxu0 0.0
      %1061 = vmatprep.subr.mxu0 0.0
      %1062 = vmatpush1.msra.mxu0 0.0
      %1063 = vmatprep.subr.mxu0 0.0
      %1064 = vmatpush1.msra.mxu0 0.0
      %1065 = vmatprep.subr.mxu0 0.0
      %1066 = vmatpush1.msra.mxu0 0.0
      %1067 = vmatprep.subr.mxu0 0.0
      %1068 = vmatpush1.msra.mxu0 0.0
      %1069 = vmatprep.subr.mxu0 0.0
      %1070 = vmatpush1.msra.mxu0 0.0
      %1071 = vmatprep.subr.mxu0 0.0
      %1072 = vmatpush1.msra.mxu0 0.0
      %1073 = vmatprep.subr.mxu0 0.0
      %1074 = vmatpush1.msra.mxu0 0.0
      %1075 = vmatprep.subr.mxu0 0.0
      %1076 = vmatpush1.msra.mxu0 0.0
      %1077 = vmatprep.subr.mxu0 0.0
      %1078 = vmatpush1.msra.mxu0 0.0
      %1079 = vmatprep.subr.mxu0 0.0
      %1080 = vmatpush1.msra.mxu0 0.0
      %1081 = vmatprep.mubr.f32.mxu0 0.0
      %1082 = vmatmul.mubr.f32.gmra.mrb[0].mxu0 %v1015
      %v1083 = vpop.f32.mrb[0].mxu0
      %v1084 = vadd.f32 %v1012, %v1083
      %v1085 = vpop.f32.mrb[0].mxu0
      %1086 = vdwg.mxu0
      %vm1087 = vcmask 39936
      %1088 = vst.msk [vmem:[#allocation7] sm:$0xff] %vm1087, %v1084
    $region29: #{tpu_custom_call.1} parent=1 // pred_fallthru
      _
    // Predicated region
    $region30: #{tpu_custom_call.1} parent=1 // pred_check
      _
    $region31: #{tpu_custom_call.1} parent=1 // pred_check_branch
      %1090 = sbr.rel (0) target = $region33
    $region32: #{tpu_custom_call.1} parent=1 // pred_region
      %s1092 = ssub.s32 128, 128
      %1093 = vsyncadd [#allocation6], %s1092
      %s1095 = sshll.u32 [#allocation7], 4
      %s1096 = int_to_ptr.vmem [resolvable:$true] %s1095
      %1098 = dma.vmem_to_hbm [thread:$0]  %s1096, 128, %s4, [#allocation6]
    $region33: #{tpu_custom_call.1} parent=1 // pred_fallthru
      _
    // Predicated region
    $region34: #{tpu_custom_call.1} parent=1 // pred_check
      _
    $region35: #{tpu_custom_call.1} parent=1 // pred_check_branch
      %1100 = sbr.rel (0) target = $region37
    $region36: #{tpu_custom_call.1} parent=1 // pred_region
      %1101 = dma.done [#allocation6], 128
    $region37: #{tpu_custom_call.1} parent=1 // pred_fallthru
      _
    %1102 = vsyncpa [#allocation5], 1
    %1103 = vsyncpa [#allocation6], 1

</llo_original>
